<compile_context>
chip_gen: v7x
topology: tpu7x:2x2x1
jax: 0.10.0
libtpu: 0.0.40
codegen_flags: <defaults>
</compile_context>

<pallas_src>
import jax
import jax.numpy as jnp
from jax.experimental import pallas as pl
from jax.experimental.pallas import tpu as pltpu

HIDDEN = 128   # module's hidden_size
SEQ = 8        # small sequence length for the example
BATCH = 2


def _bahdanau_kernel(q_ref, k_ref, wa_ref, ua_ref, b_ref, va_ref, ctx_ref, wts_ref):
    # Per grid step (one batch element):
    #   q_ref  : (1, 1, H)  query tile            (streams per step)
    #   k_ref  : (1, S, H)  keys tile             (streams per step)
    #   wa_ref : (H, H)     Wa, pre-transposed    (VMEM-resident, constant index_map)
    #   ua_ref : (H, H)     Ua, pre-transposed    (VMEM-resident)
    #   b_ref  : (1, H)     fused bias b_Wa+b_Ua  (VMEM-resident, f32)
    #   va_ref : (1, H)     Va weight row         (VMEM-resident)
    #   ctx_ref: (1, 1, H)  context output
    #   wts_ref: (1, S, 1)  attention weights (column layout; transposed in wrapper)
    _, S, H = k_ref.shape

    q = q_ref[...].reshape(1, H)                                     # (1, H)
    k = k_ref[...].reshape(S, H)                                     # (S, H)

    # MXU matmuls; f32 accumulation, full-precision contraction (bf16 weights
    # are promoted to f32 in-kernel -- the win is halved HBM/DMA traffic).
    wq = jnp.dot(q, wa_ref[...], preferred_element_type=jnp.float32,
                 precision=jax.lax.Precision.HIGHEST)                # (1, H)
    uk = jnp.dot(k, ua_ref[...], preferred_element_type=jnp.float32,
                 precision=jax.lax.Precision.HIGHEST)                # (S, H)

    # Bias folded into the (1, H) row before the sublane broadcast.
    t = jnp.tanh(uk + (wq + b_ref[...]))                             # (S, H)

    # Va projection + softmax + context, all in (S, 1) column layout:
    s_col = jnp.sum(t * va_ref[...], axis=1, keepdims=True)          # (S, 1) lane reduce
    m = jnp.max(s_col, axis=0, keepdims=True)                        # (1, 1)
    e = jnp.exp(s_col - m)                                           # (S, 1)
    w = e / jnp.sum(e, axis=0, keepdims=True)                        # (S, 1), exact division
    ctx = jnp.sum(w * k, axis=0, keepdims=True)                      # (1, H) sublane reduce

    ctx_ref[...] = ctx.reshape(1, 1, H).astype(ctx_ref.dtype)
    wts_ref[...] = w.reshape(1, S, 1).astype(wts_ref.dtype)


def prepare_params(wa_w, wa_b, ua_w, ua_b, va_w, va_b, weight_dtype=jnp.float32):
    """One-time parameter prep, hoisted out of the per-step hot path.

    torch nn.Linear stores W as (out, in); the kernel computes x @ W, so transpose.
    b_Va is dropped (softmax is invariant to a constant score shift); b_Wa + b_Ua
    are fused into one (1, H) row kept in f32.  weight_dtype=jnp.bfloat16 halves
    the resident-weight DMA; kernel accumulation stays f32 either way.
    """
    del va_b
    h = wa_w.shape[0]
    wa_t = wa_w.T.astype(weight_dtype)                # (H, H)
    ua_t = ua_w.T.astype(weight_dtype)                # (H, H)
    bias = (wa_b + ua_b).reshape(1, h).astype(jnp.float32)
    va_row = va_w.reshape(1, h).astype(weight_dtype)
    return wa_t, ua_t, bias, va_row


@jax.jit
def bahdanau_attention(query, keys, params):
    """query: (B, 1, H), keys: (B, S, H); params from prepare_params()."""
    wa_t, ua_t, bias, va_row = params
    B, _, H = query.shape
    S = keys.shape[1]

    ctx, wts_col = pl.pallas_call(
        _bahdanau_kernel,
        grid=(B,),
        in_specs=[
            pl.BlockSpec((1, 1, H), lambda b: (b, 0, 0)),   # query tile (streams)
            pl.BlockSpec((1, S, H), lambda b: (b, 0, 0)),   # keys tile (streams)
            pl.BlockSpec((H, H), lambda b: (0, 0)),         # Wa (resident)
            pl.BlockSpec((H, H), lambda b: (0, 0)),         # Ua (resident)
            pl.BlockSpec((1, H), lambda b: (0, 0)),         # fused bias (resident)
            pl.BlockSpec((1, H), lambda b: (0, 0)),         # Va row (resident)
        ],
        out_specs=(
            pl.BlockSpec((1, 1, H), lambda b: (b, 0, 0)),   # context
            pl.BlockSpec((1, S, 1), lambda b: (b, 0, 0)),   # weights (column layout)
        ),
        out_shape=(
            jax.ShapeDtypeStruct((B, 1, H), query.dtype),
            jax.ShapeDtypeStruct((B, S, 1), query.dtype),
        ),
        compiler_params=pltpu.CompilerParams(
            dimension_semantics=("parallel",)),   # v7x: shard grid over both TCs
    )(query, keys, wa_t, ua_t, bias, va_row)

    # Tiny (B, S, 1) -> (B, 1, S) transpose kept in the wrapper so the in-kernel
    # score/softmax/context chain never leaves the column layout.
    return ctx, jnp.transpose(wts_col, (0, 2, 1))


def _reference(query, keys, wa_w, wa_b, ua_w, ua_b, va_w, va_b):
    """Pure-JAX reference of the torch module, f32 math, full-precision matmuls."""
    p = jax.lax.Precision.HIGHEST
    f32 = jnp.float32
    wq = jnp.matmul(query, wa_w.T.astype(f32), precision=p) + wa_b       # (B,1,H)
    uk = jnp.matmul(keys, ua_w.T.astype(f32), precision=p) + ua_b        # (B,S,H)
    scores = jnp.matmul(jnp.tanh(wq + uk), va_w.T.astype(f32), precision=p) + va_b
    scores = jnp.transpose(scores, (0, 2, 1))                            # (B,1,S)
    weights = jax.nn.softmax(scores, axis=-1)
    context = jnp.einsum("bos,bsh->boh", weights, keys, precision=p)
    return context, weights


if __name__ == "__main__":
    key = jax.random.PRNGKey(0)
    k0, k1, k2, k3, k4, k5, k6, k7 = jax.random.split(key, 8)

    H, S, B = HIDDEN, SEQ, BATCH
    query = jax.random.normal(k0, (B, 1, H), dtype=jnp.float32)
    keys = jax.random.normal(k1, (B, S, H), dtype=jnp.float32)

    # Deterministic parameter init (torch nn.Linear shapes: W (out,in), b (out,)).
    scale = 1.0 / jnp.sqrt(H)
    wa_w = jax.random.uniform(k2, (H, H), minval=-scale, maxval=scale, dtype=jnp.float32)
    wa_b = jax.random.uniform(k3, (H,), minval=-scale, maxval=scale, dtype=jnp.float32)
    ua_w = jax.random.uniform(k4, (H, H), minval=-scale, maxval=scale, dtype=jnp.float32)
    ua_b = jax.random.uniform(k5, (H,), minval=-scale, maxval=scale, dtype=jnp.float32)
    va_w = jax.random.uniform(k6, (1, H), minval=-scale, maxval=scale, dtype=jnp.float32)
    va_b = jax.random.uniform(k7, (1,), minval=-scale, maxval=scale, dtype=jnp.float32)

    # ---- f32 resident weights: tight check against the f32 reference. ----------
    params_f32 = prepare_params(wa_w, wa_b, ua_w, ua_b, va_w, va_b)
    ctx, wts = bahdanau_attention(query, keys, params_f32)
    jax.block_until_ready((ctx, wts))

    ctx_ref, wts_ref = _reference(query, keys, wa_w, wa_b, ua_w, ua_b, va_w, va_b)
    assert ctx.shape == (B, 1, H) and wts.shape == (B, 1, S)
    # Exact-division softmax: attention weights sum to 1.
    assert jnp.allclose(jnp.sum(wts, axis=-1), 1.0, atol=1e-6)
    assert jnp.allclose(ctx, ctx_ref, atol=1e-5, rtol=1e-5)
    assert jnp.allclose(wts, wts_ref, atol=1e-5, rtol=1e-5)

    # ---- bf16 resident weights (halved weight DMA): checked against a reference
    #      using the SAME bf16-quantized weights, so only the kernel path (not the
    #      quantization choice) is under test. -----------------------------------
    params_bf16 = prepare_params(wa_w, wa_b, ua_w, ua_b, va_w, va_b,
                                 weight_dtype=jnp.bfloat16)
    ctx_b, wts_b = bahdanau_attention(query, keys, params_bf16)
    jax.block_until_ready((ctx_b, wts_b))
    ctx_qref, wts_qref = _reference(
        query, keys,
        wa_w.astype(jnp.bfloat16), wa_b,
        ua_w.astype(jnp.bfloat16), ua_b,
        va_w.astype(jnp.bfloat16), va_b)
    assert jnp.allclose(ctx_b, ctx_qref, atol=1e-5, rtol=1e-5)
    assert jnp.allclose(wts_b, wts_qref, atol=1e-5, rtol=1e-5)

    print("KERNEL_OK")
</pallas_src>

<mosaic_0001>
module attributes {stable_mosaic.version = 11 : i64} {
  func.func @_bahdanau_kernel(%arg0: i32, %arg1: memref<1x1x128xf32, #tpu.memory_space<vmem>>, %arg2: memref<1x8x128xf32, #tpu.memory_space<vmem>>, %arg3: memref<128x128xf32, #tpu.memory_space<vmem>>, %arg4: memref<128x128xf32, #tpu.memory_space<vmem>>, %arg5: memref<1x128xf32, #tpu.memory_space<vmem>>, %arg6: memref<1x128xf32, #tpu.memory_space<vmem>>, %arg7: memref<1x1x128xf32, #tpu.memory_space<vmem>>, %arg8: memref<1x8x1xf32, #tpu.memory_space<vmem>>) attributes {dimension_semantics = [#tpu.dimension_semantics<parallel>], iteration_bounds = array<i64: 2>, scalar_prefetch = 0 : i64, scratch_operands = 0 : i64, tpu.core_type = #tpu.core_type<tc>, window_params = [{transform_indices = @transform_0, window_bounds = array<i64: 1, 1, 128>}, {transform_indices = @transform_1, window_bounds = array<i64: 1, 8, 128>}, {pipeline_mode = #tpu.pipeline_mode<synchronous>, transform_indices = @transform_2, window_bounds = array<i64: 128, 128>}, {pipeline_mode = #tpu.pipeline_mode<synchronous>, transform_indices = @transform_3, window_bounds = array<i64: 128, 128>}, {pipeline_mode = #tpu.pipeline_mode<synchronous>, transform_indices = @transform_4, window_bounds = array<i64: 1, 128>}, {pipeline_mode = #tpu.pipeline_mode<synchronous>, transform_indices = @transform_5, window_bounds = array<i64: 1, 128>}, {transform_indices = @transform_6, window_bounds = array<i64: 1, 1, 128>}, {transform_indices = @transform_7, window_bounds = array<i64: 1, 8, 1>}]} {
    %c0 = arith.constant 0 : index
    %c0_0 = arith.constant 0 : index
    %c0_1 = arith.constant 0 : index
    %0 = vector.load %arg1[%c0, %c0_0, %c0_1] : memref<1x1x128xf32, #tpu.memory_space<vmem>>, vector<1x1x128xf32>
    %1 = vector.shape_cast %0 : vector<1x1x128xf32> to vector<1x128xf32>
    %c0_2 = arith.constant 0 : index
    %c0_3 = arith.constant 0 : index
    %c0_4 = arith.constant 0 : index
    %2 = vector.load %arg2[%c0_2, %c0_3, %c0_4] : memref<1x8x128xf32, #tpu.memory_space<vmem>>, vector<1x8x128xf32>
    %3 = vector.shape_cast %2 : vector<1x8x128xf32> to vector<8x128xf32>
    %c0_5 = arith.constant 0 : index
    %c0_6 = arith.constant 0 : index
    %4 = vector.load %arg3[%c0_5, %c0_6] : memref<128x128xf32, #tpu.memory_space<vmem>>, vector<128x128xf32>
    %cst = arith.constant dense<0.000000e+00> : vector<1x128xf32>
    %5 = tpu.matmul %1, %4, %cst {dimension_numbers = #tpu.dot_dimension_numbers<[1], [0], [0], [1], [0, 0, 1, 1], [], []>, precision = #tpu.contract_precision<fp32>} : vector<1x128xf32>, vector<128x128xf32>, vector<1x128xf32> -> vector<1x128xf32>
    %c0_7 = arith.constant 0 : index
    %c0_8 = arith.constant 0 : index
    %6 = vector.load %arg4[%c0_7, %c0_8] : memref<128x128xf32, #tpu.memory_space<vmem>>, vector<128x128xf32>
    %cst_9 = arith.constant dense<0.000000e+00> : vector<8x128xf32>
    %7 = tpu.matmul %3, %6, %cst_9 {dimension_numbers = #tpu.dot_dimension_numbers<[1], [0], [0], [1], [0, 0, 1, 1], [], []>, precision = #tpu.contract_precision<fp32>} : vector<8x128xf32>, vector<128x128xf32>, vector<8x128xf32> -> vector<8x128xf32>
    %c0_10 = arith.constant 0 : index
    %c0_11 = arith.constant 0 : index
    %8 = vector.load %arg5[%c0_10, %c0_11] : memref<1x128xf32, #tpu.memory_space<vmem>>, vector<1x128xf32>
    %9 = arith.addf %5, %8 : vector<1x128xf32>
    %10 = vector.broadcast %9 : vector<1x128xf32> to vector<8x128xf32>
    %11 = arith.addf %7, %10 : vector<8x128xf32>
    %12 = math.tanh %11 : vector<8x128xf32>
    %c0_12 = arith.constant 0 : index
    %c0_13 = arith.constant 0 : index
    %13 = vector.load %arg6[%c0_12, %c0_13] : memref<1x128xf32, #tpu.memory_space<vmem>>, vector<1x128xf32>
    %14 = vector.broadcast %13 : vector<1x128xf32> to vector<8x128xf32>
    %15 = arith.mulf %12, %14 : vector<8x128xf32>
    %cst_14 = arith.constant dense<0.000000e+00> : vector<8xf32>
    %16 = vector.multi_reduction <add>, %15, %cst_14 [1] : vector<8x128xf32> to vector<8xf32>
    %17 = vector.shape_cast %16 : vector<8xf32> to vector<8x1xf32>
    %cst_15 = arith.constant dense<0xFF800000> : vector<1xf32>
    %18 = vector.multi_reduction <maximumf>, %17, %cst_15 [0] : vector<8x1xf32> to vector<1xf32>
    %19 = vector.shape_cast %18 : vector<1xf32> to vector<1x1xf32>
    %20 = vector.broadcast %19 : vector<1x1xf32> to vector<8x1xf32>
    %21 = arith.subf %17, %20 : vector<8x1xf32>
    %22 = math.exp %21 : vector<8x1xf32>
    %cst_16 = arith.constant dense<0.000000e+00> : vector<1xf32>
    %23 = vector.multi_reduction <add>, %22, %cst_16 [0] : vector<8x1xf32> to vector<1xf32>
    %24 = vector.shape_cast %23 : vector<1xf32> to vector<1x1xf32>
    %25 = vector.broadcast %24 : vector<1x1xf32> to vector<8x1xf32>
    %26 = arith.divf %22, %25 : vector<8x1xf32>
    %27 = vector.broadcast %26 : vector<8x1xf32> to vector<8x128xf32>
    %28 = arith.mulf %27, %3 : vector<8x128xf32>
    %cst_17 = arith.constant dense<0.000000e+00> : vector<128xf32>
    %29 = vector.multi_reduction <add>, %28, %cst_17 [0] : vector<8x128xf32> to vector<128xf32>
    %30 = vector.shape_cast %29 : vector<128xf32> to vector<1x128xf32>
    %31 = vector.shape_cast %30 : vector<1x128xf32> to vector<1x1x128xf32>
    %c0_18 = arith.constant 0 : index
    %c0_19 = arith.constant 0 : index
    %c0_20 = arith.constant 0 : index
    %32 = vector.load %arg7[%c0_18, %c0_19, %c0_20] : memref<1x1x128xf32, #tpu.memory_space<vmem>>, vector<1x1x128xf32>
    tpu.vector_store %arg7[%c0_18, %c0_19, %c0_20], %31 {strides = array<i32>} : memref<1x1x128xf32, #tpu.memory_space<vmem>>, vector<1x1x128xf32>,
    %33 = vector.shape_cast %26 : vector<8x1xf32> to vector<1x8x1xf32>
    %c0_21 = arith.constant 0 : index
    %c0_22 = arith.constant 0 : index
    %c0_23 = arith.constant 0 : index
    %34 = vector.load %arg8[%c0_21, %c0_22, %c0_23] : memref<1x8x1xf32, #tpu.memory_space<vmem>>, vector<1x8x1xf32>
    tpu.vector_store %arg8[%c0_21, %c0_22, %c0_23], %33 {strides = array<i32>} : memref<1x8x1xf32, #tpu.memory_space<vmem>>, vector<1x8x1xf32>,
    return
  }
  func.func @transform_0(%arg0: i32) -> (i32, i32, i32) {
    %c0_i32 = arith.constant 0 : i32
    %c0_i32_0 = arith.constant 0 : i32
    %c0_i32_1 = arith.constant 0 : i32
    return %arg0, %c0_i32, %c0_i32_0 : i32, i32, i32
  }
  func.func @transform_1(%arg0: i32) -> (i32, i32, i32) {
    %c0_i32 = arith.constant 0 : i32
    %c0_i32_0 = arith.constant 0 : i32
    %c0_i32_1 = arith.constant 0 : i32
    return %arg0, %c0_i32, %c0_i32_0 : i32, i32, i32
  }
  func.func @transform_2(%arg0: i32) -> (i32, i32) {
    %c0_i32 = arith.constant 0 : i32
    %c0_i32_0 = arith.constant 0 : i32
    %c0_i32_1 = arith.constant 0 : i32
    return %c0_i32, %c0_i32_0 : i32, i32
  }
  func.func @transform_3(%arg0: i32) -> (i32, i32) {
    %c0_i32 = arith.constant 0 : i32
    %c0_i32_0 = arith.constant 0 : i32
    %c0_i32_1 = arith.constant 0 : i32
    return %c0_i32, %c0_i32_0 : i32, i32
  }
  func.func @transform_4(%arg0: i32) -> (i32, i32) {
    %c0_i32 = arith.constant 0 : i32
    %c0_i32_0 = arith.constant 0 : i32
    %c0_i32_1 = arith.constant 0 : i32
    return %c0_i32, %c0_i32_0 : i32, i32
  }
  func.func @transform_5(%arg0: i32) -> (i32, i32) {
    %c0_i32 = arith.constant 0 : i32
    %c0_i32_0 = arith.constant 0 : i32
    %c0_i32_1 = arith.constant 0 : i32
    return %c0_i32, %c0_i32_0 : i32, i32
  }
  func.func @transform_6(%arg0: i32) -> (i32, i32, i32) {
    %c0_i32 = arith.constant 0 : i32
    %c0_i32_0 = arith.constant 0 : i32
    %c0_i32_1 = arith.constant 0 : i32
    return %arg0, %c0_i32, %c0_i32_0 : i32, i32, i32
  }
  func.func @transform_7(%arg0: i32) -> (i32, i32, i32) {
    %c0_i32 = arith.constant 0 : i32
    %c0_i32_0 = arith.constant 0 : i32
    %c0_i32_1 = arith.constant 0 : i32
    return %arg0, %c0_i32, %c0_i32_0 : i32, i32, i32
  }
}

</mosaic_0001>

<llo_original>
// kernel: bahdanau_attention.1
$region0: #{bahdanau_attention.1}
  #allocation0 [shape = 'u32[]', space=smem, size = 0x4, offset = 0x4, fixed_abs, tag = 'smem constant byte address 0x4 - core index']
  #allocation1 [shape = 'u32[144,128]{1,0:T(1,128)}', space=vmem, size = 0x12000, scoped, tag = 'internal scratch']
  %s0 = inlined_call_operand.hbm [shape: f32[2,1,128], index: 0, kind: input, shape index: {}]
  %s1 = inlined_call_operand.hbm [shape: f32[2,8,128], index: 1, kind: input, shape index: {}]
  %s2 = inlined_call_operand.hbm [shape: f32[128,128], index: 2, kind: input, shape index: {}]
  %s3 = inlined_call_operand.hbm [shape: f32[128,128], index: 3, kind: input, shape index: {}]
  %s4 = inlined_call_operand.vmem [shape: f32[1,128], index: 4, kind: input, shape index: {}]
  %s5 = inlined_call_operand.vmem [shape: f32[1,128], index: 5, kind: input, shape index: {}]
  %s6 = inlined_call_operand.hbm [shape: f32[2,1,128], index: 6, kind: output, shape index: {0}]
  %s7 = inlined_call_operand.vmem [shape: f32[2,8,1], index: 7, kind: output, shape index: {1}]
  %8 = xla_tuple %s6, %s7
  %s9 = sld [smem:[#allocation0]]
  $region81: #{bahdanau_attention.1} parent=0
    _
  %s11 = ssub.s32 1, %s9
  %s12 = scalar_select 0, %s11, %s9
  $region1: #{bahdanau_attention.1} parent=0
    #allocation2 [shape = 'u8[1024]{0}', space=vmem, size = 0x400, scoped, tag = 'input window, operand 0']
    #allocation3 [shape = 's32[2]{0}', space=sflag, size = 0x8, scoped, tag = 'scoped memory for bahdanau_attention.1']
    #allocation4 [shape = 's32[2]{0}', space=sflag, size = 0x8, scoped, tag = 'scoped memory for bahdanau_attention.1']
    #allocation5 [shape = 'u8[8192]{0}', space=vmem, size = 0x2000, scoped, tag = 'input window, operand 1']
    #allocation6 [shape = 's32[2]{0}', space=sflag, size = 0x8, scoped, tag = 'scoped memory for bahdanau_attention.1']
    #allocation7 [shape = 'u8[65536]{0}', space=vmem, size = 0x10000, scoped, tag = 'input window, operand 2, single buffered']
    #allocation8 [shape = 'u8[65536]{0}', space=vmem, size = 0x10000, scoped, tag = 'input window, operand 3, single buffered']
    #allocation9 [shape = 's32[1]{0}', space=sflag, size = 0x4, scoped, tag = 'scoped memory for bahdanau_attention.1']
    #allocation10 [shape = 'u8[1024]{0}', space=vmem, size = 0x400, scoped, tag = 'output window, operand 0']
    %13 = vsyncpa [#allocation3], 0
    %s14 = scalar_lea.sflag [#allocation3], 1
    %15 = vsyncpa %s14, 0
    %16 = vsyncpa [#allocation6], 0
    %s17 = scalar_lea.sflag [#allocation6], 1
    %18 = vsyncpa %s17, 0
    %19 = vsyncpa [#allocation9], 0
    %20 = vsyncpa [#allocation4], 0
    %s21 = scalar_lea.sflag [#allocation4], 1
    %22 = vsyncpa %s21, 0
    loop: start=0, step=1, limit=4
    $region2: #{bahdanau_attention.1} parent=1 // loop_pre_header
      _
    $region3: #{bahdanau_attention.1} parent=1 // loop_header
      %s24 = sphi 0, %s28
      %p25 = scmp.ge.s32.totalorder %s24, 4
      %s34 = sphi 0, %s36
      %s37 = sphi 0, %s34
      %s38 = sphi 0, %s37
      %s54 = sphi 0, %s38
      %s60 = sphi 0, %s62
      %s63 = sphi 0, %s60
      %s64 = sphi 0, %s63
      %s80 = sphi 0, %s64
      %s84 = sphi 0, %s84
      %s86 = sphi 0, %s84
      %s87 = sphi 0, %s86
      %s101 = sphi 0, %s87
      %s105 = sphi 0, %s105
      %s107 = sphi 0, %s105
      %s108 = sphi 0, %s107
      %s122 = sphi 0, %s108
      %s126 = sphi 0, %s126
      %s128 = sphi 0, %s126
      %s129 = sphi 0, %s128
      %s143 = sphi 0, %s129
      %s147 = sphi 0, %s147
      %s149 = sphi 0, %s147
      %s150 = sphi 0, %s149
      %s164 = sphi 0, %s150
      %s170 = sphi 0, %s172
      %s173 = sphi 0, %s170
      %s174 = sphi 0, %s173
      %s190 = sphi 0, %s174
      %s196 = sphi 0, %s198
      %s199 = sphi 0, %s196
      %s200 = sphi 0, %s199
      %s216 = sphi 0, %s200
    $region4: #{bahdanau_attention.1} parent=1 // loop_header_branch
      %27 = sbr.rel (%p25) target = $region8
    $region5: #{bahdanau_attention.1} parent=1 // loop_body
      %s29 = ssub.s32 %s24, 1
      %s30 = ssub.s32 %s24, 2
      %s31 = sadd.s32 %s24, 1
      %s32 = ssub.s32 %s24, %s31
      %p33 = scmp.eq.s32.totalorder %s32, 0
      %s35 = sadd.s32 %s34, 1
      %s36 = scalar_select %p33, %s34, %s35
      %p39 = pneg %p33
      %p40 = scmp.eq.s32.totalorder %s24, 1
      %p41 = por %p39, %p40
      %p42 = scmp.ne.s32.totalorder %s34, %s37
      %p43 = scmp.eq.s32.totalorder %s24, 0
      %p44 = por %p42, %p43
      %p45 = scmp.ne.s32.totalorder %s34, %s37
      %p46 = scmp.eq.s32.totalorder %s29, 1
      %p47 = por %p45, %p46
      %p48 = scmp.ne.s32.totalorder %s37, %s38
      %p49 = scmp.eq.s32.totalorder %s29, 0
      %p50 = por %p48, %p49
      %p51 = scmp.ne.s32.totalorder %s37, %s38
      %p52 = scmp.eq.s32.totalorder %s30, 1
      %p53 = por %p51, %p52
      %p55 = scmp.ne.s32.totalorder %s38, %s54
      %p56 = scmp.eq.s32.totalorder %s30, 0
      %p57 = por %p55, %p56
      %s58 = ssub.s32 %s24, %s31
      %p59 = scmp.eq.s32.totalorder %s58, 0
      %s61 = sadd.s32 %s60, 1
      %s62 = scalar_select %p59, %s60, %s61
      %p65 = pneg %p59
      %p66 = scmp.eq.s32.totalorder %s24, 1
      %p67 = por %p65, %p66
      %p68 = scmp.ne.s32.totalorder %s60, %s63
      %p69 = scmp.eq.s32.totalorder %s24, 0
      %p70 = por %p68, %p69
      %p71 = scmp.ne.s32.totalorder %s60, %s63
      %p72 = scmp.eq.s32.totalorder %s29, 1
      %p73 = por %p71, %p72
      %p74 = scmp.ne.s32.totalorder %s63, %s64
      %p75 = scmp.eq.s32.totalorder %s29, 0
      %p76 = por %p74, %p75
      %p77 = scmp.ne.s32.totalorder %s63, %s64
      %p78 = scmp.eq.s32.totalorder %s30, 1
      %p79 = por %p77, %p78
      %p81 = scmp.ne.s32.totalorder %s64, %s80
      %p82 = scmp.eq.s32.totalorder %s30, 0
      %p83 = por %p81, %p82
      %s85 = sadd.s32 %s84, 1
      %p88 = scmp.eq.s32.totalorder %s24, 1
      %p89 = scmp.ne.s32.totalorder %s84, %s86
      %p90 = scmp.eq.s32.totalorder %s24, 0
      %p91 = por %p89, %p90
      %p92 = scmp.ne.s32.totalorder %s84, %s86
      %p93 = scmp.eq.s32.totalorder %s29, 1
      %p94 = por %p92, %p93
      %p95 = scmp.ne.s32.totalorder %s86, %s87
      %p96 = scmp.eq.s32.totalorder %s29, 0
      %p97 = por %p95, %p96
      %p98 = scmp.ne.s32.totalorder %s86, %s87
      %p99 = scmp.eq.s32.totalorder %s30, 1
      %p100 = por %p98, %p99
      %p102 = scmp.ne.s32.totalorder %s87, %s101
      %p103 = scmp.eq.s32.totalorder %s30, 0
      %p104 = por %p102, %p103
      %s106 = sadd.s32 %s105, 1
      %p109 = scmp.eq.s32.totalorder %s24, 1
      %p110 = scmp.ne.s32.totalorder %s105, %s107
      %p111 = scmp.eq.s32.totalorder %s24, 0
      %p112 = por %p110, %p111
      %p113 = scmp.ne.s32.totalorder %s105, %s107
      %p114 = scmp.eq.s32.totalorder %s29, 1
      %p115 = por %p113, %p114
      %p116 = scmp.ne.s32.totalorder %s107, %s108
      %p117 = scmp.eq.s32.totalorder %s29, 0
      %p118 = por %p116, %p117
      %p119 = scmp.ne.s32.totalorder %s107, %s108
      %p120 = scmp.eq.s32.totalorder %s30, 1
      %p121 = por %p119, %p120
      %p123 = scmp.ne.s32.totalorder %s108, %s122
      %p124 = scmp.eq.s32.totalorder %s30, 0
      %p125 = por %p123, %p124
      %s127 = sadd.s32 %s126, 1
      %p130 = scmp.eq.s32.totalorder %s24, 1
      %p131 = scmp.ne.s32.totalorder %s126, %s128
      %p132 = scmp.eq.s32.totalorder %s24, 0
      %p133 = por %p131, %p132
      %p134 = scmp.ne.s32.totalorder %s126, %s128
      %p135 = scmp.eq.s32.totalorder %s29, 1
      %p136 = por %p134, %p135
      %p137 = scmp.ne.s32.totalorder %s128, %s129
      %p138 = scmp.eq.s32.totalorder %s29, 0
      %p139 = por %p137, %p138
      %p140 = scmp.ne.s32.totalorder %s128, %s129
      %p141 = scmp.eq.s32.totalorder %s30, 1
      %p142 = por %p140, %p141
      %p144 = scmp.ne.s32.totalorder %s129, %s143
      %p145 = scmp.eq.s32.totalorder %s30, 0
      %p146 = por %p144, %p145
      %s148 = sadd.s32 %s147, 1
      %p151 = scmp.eq.s32.totalorder %s24, 1
      %p152 = scmp.ne.s32.totalorder %s147, %s149
      %p153 = scmp.eq.s32.totalorder %s24, 0
      %p154 = por %p152, %p153
      %p155 = scmp.ne.s32.totalorder %s147, %s149
      %p156 = scmp.eq.s32.totalorder %s29, 1
      %p157 = por %p155, %p156
      %p158 = scmp.ne.s32.totalorder %s149, %s150
      %p159 = scmp.eq.s32.totalorder %s29, 0
      %p160 = por %p158, %p159
      %p161 = scmp.ne.s32.totalorder %s149, %s150
      %p162 = scmp.eq.s32.totalorder %s30, 1
      %p163 = por %p161, %p162
      %p165 = scmp.ne.s32.totalorder %s150, %s164
      %p166 = scmp.eq.s32.totalorder %s30, 0
      %p167 = por %p165, %p166
      %s168 = ssub.s32 %s24, %s31
      %p169 = scmp.eq.s32.totalorder %s168, 0
      %s171 = sadd.s32 %s170, 1
      %s172 = scalar_select %p169, %s170, %s171
      %p175 = pneg %p169
      %p176 = scmp.eq.s32.totalorder %s24, 1
      %p177 = por %p175, %p176
      %p178 = scmp.ne.s32.totalorder %s170, %s173
      %p179 = scmp.eq.s32.totalorder %s24, 0
      %p180 = por %p178, %p179
      %p181 = scmp.ne.s32.totalorder %s170, %s173
      %p182 = scmp.eq.s32.totalorder %s29, 1
      %p183 = por %p181, %p182
      %p184 = scmp.ne.s32.totalorder %s173, %s174
      %p185 = scmp.eq.s32.totalorder %s29, 0
      %p186 = por %p184, %p185
      %p187 = scmp.ne.s32.totalorder %s173, %s174
      %p188 = scmp.eq.s32.totalorder %s30, 1
      %p189 = por %p187, %p188
      %p191 = scmp.ne.s32.totalorder %s174, %s190
      %p192 = scmp.eq.s32.totalorder %s30, 0
      %p193 = por %p191, %p192
      %s194 = ssub.s32 %s24, %s31
      %p195 = scmp.eq.s32.totalorder %s194, 0
      %s197 = sadd.s32 %s196, 1
      %s198 = scalar_select %p195, %s196, %s197
      %p201 = pneg %p195
      %p202 = scmp.eq.s32.totalorder %s24, 1
      %p203 = por %p201, %p202
      %p204 = scmp.ne.s32.totalorder %s196, %s199
      %p205 = scmp.eq.s32.totalorder %s24, 0
      %p206 = por %p204, %p205
      %p207 = scmp.ne.s32.totalorder %s196, %s199
      %p208 = scmp.eq.s32.totalorder %s29, 1
      %p209 = por %p207, %p208
      %p210 = scmp.ne.s32.totalorder %s199, %s200
      %p211 = scmp.eq.s32.totalorder %s29, 0
      %p212 = por %p210, %p211
      %p213 = scmp.ne.s32.totalorder %s199, %s200
      %p214 = scmp.eq.s32.totalorder %s30, 1
      %p215 = por %p213, %p214
      %p217 = scmp.ne.s32.totalorder %s200, %s216
      %p218 = scmp.eq.s32.totalorder %s30, 0
      %p219 = por %p217, %p218
      %p220 = scmp.le.s32.totalorder 1, %s24
      %p221 = scmp.lt.s32.totalorder %s24, 3
      %p222 = pnand %p220, %p221
      %p223 = pneg %p222
      // Predicated region
      $region9: #{bahdanau_attention.1} parent=5 // pred_check
        _
      $region10: #{bahdanau_attention.1} parent=5 // pred_check_branch
        %225 = sbr.rel (%p222) target = $region12
      $region11: #{bahdanau_attention.1} parent=5 // pred_region
        %s226 = ssub.s32 %s24, 1
        // Predicated region
        $region13: #{bahdanau_attention.1} parent=11 // pred_check
          %p227 = pneg %p97
        $region14: #{bahdanau_attention.1} parent=11 // pred_check_branch
          %229 = sbr.rel (%p227) target = $region16
        $region15: #{bahdanau_attention.1} parent=11 // pred_region
          %s231 = ssub.s32 2048, 2048
          %232 = vsyncadd [#allocation6], %s231
          %s233 = sshll.u32 [#allocation7], 4
          %s234 = int_to_ptr.vmem [resolvable:$true] %s233
          %239 = dma.hbm_to_vmem [thread:$0]  %s2, 2048, %s234, [#allocation6], 128, 128, 8
        $region16: #{bahdanau_attention.1} parent=11 // pred_fallthru
          _
        // Predicated region
        $region17: #{bahdanau_attention.1} parent=11 // pred_check
          %p240 = pneg %p118
        $region18: #{bahdanau_attention.1} parent=11 // pred_check_branch
          %242 = sbr.rel (%p240) target = $region20
        $region19: #{bahdanau_attention.1} parent=11 // pred_region
          %s244 = ssub.s32 2048, 2048
          %245 = vsyncadd [#allocation9], %s244
          %s246 = sshll.u32 [#allocation8], 4
          %s247 = int_to_ptr.vmem [resolvable:$true] %s246
          %252 = dma.hbm_to_vmem [thread:$0]  %s3, 2048, %s247, [#allocation9], 128, 128, 8
        $region20: #{bahdanau_attention.1} parent=11 // pred_fallthru
          _
        // Predicated region
        $region21: #{bahdanau_attention.1} parent=11 // pred_check
          %p253 = pneg %p139
        $region22: #{bahdanau_attention.1} parent=11 // pred_check_branch
          %255 = sbr.rel (%p253) target = $region24
        $region23: #{bahdanau_attention.1} parent=11 // pred_region
          _
        $region24: #{bahdanau_attention.1} parent=11 // pred_fallthru
          _
        // Predicated region
        $region25: #{bahdanau_attention.1} parent=11 // pred_check
          %p256 = pneg %p160
        $region26: #{bahdanau_attention.1} parent=11 // pred_check_branch
          %258 = sbr.rel (%p256) target = $region28
        $region27: #{bahdanau_attention.1} parent=11 // pred_region
          _
        $region28: #{bahdanau_attention.1} parent=11 // pred_fallthru
          _
      $region12: #{bahdanau_attention.1} parent=5 // pred_fallthru
        _
      %p259 = scmp.lt.s32.totalorder %s24, 2
      // Predicated region
      $region29: #{bahdanau_attention.1} parent=5 // pred_check
        %p260 = pneg %p259
      $region30: #{bahdanau_attention.1} parent=5 // pred_check_branch
        %262 = sbr.rel (%p260) target = $region32
      $region31: #{bahdanau_attention.1} parent=5 // pred_region
        // Predicated region
        $region33: #{bahdanau_attention.1} parent=31 // pred_check
          %p263 = pneg %p44
        $region34: #{bahdanau_attention.1} parent=31 // pred_check_branch
          %265 = sbr.rel (%p263) target = $region36
        $region35: #{bahdanau_attention.1} parent=31 // pred_region
          %s266 = sand.u32 %s34, 1
          %s267 = scalar_lea.sflag [#allocation3], %s266
          %s268 = sand.u32 %s34, 1
          %s269 = scalar_lea.vmem [#allocation2], %s268
          %s271 = ssub.s32 16, 16
          %272 = vsyncadd %s267, %s271
          %s273 = smul.addr %s24, 16
          %s274 = scalar_lea.hbm %s0, %s273
          %s276 = sshll.u32 %s269, 4
          %s277 = int_to_ptr.vmem [resolvable:$true] %s276
          %279 = dma.hbm_to_vmem [thread:$0]  %s274, 16, %s277, %s267
        $region36: #{bahdanau_attention.1} parent=31 // pred_fallthru
          _
        // Predicated region
        $region37: #{bahdanau_attention.1} parent=31 // pred_check
          %p280 = pneg %p70
        $region38: #{bahdanau_attention.1} parent=31 // pred_check_branch
          %282 = sbr.rel (%p280) target = $region40
        $region39: #{bahdanau_attention.1} parent=31 // pred_region
          %s283 = sand.u32 %s24, 1
          %s284 = scalar_lea.sflag [#allocation6], %s283
          %s285 = sand.u32 %s60, 1
          %s286 = smul.addr %s285, 8
          %s287 = scalar_lea.vmem [#allocation5], %s286
          %s289 = ssub.s32 128, 128
          %290 = vsyncadd %s284, %s289
          %s291 = smul.addr %s24, 128
          %s292 = scalar_lea.hbm %s1, %s291
          %s294 = sshll.u32 %s287, 4
          %s295 = int_to_ptr.vmem [resolvable:$true] %s294
          %297 = dma.hbm_to_vmem [thread:$0]  %s292, 128, %s295, %s284
        $region40: #{bahdanau_attention.1} parent=31 // pred_fallthru
          _
      $region32: #{bahdanau_attention.1} parent=5 // pred_fallthru
        _
      %p298 = scmp.le.s32.totalorder 1, %s24
      %p299 = scmp.lt.s32.totalorder %s24, 3
      %p300 = pnand %p298, %p299
      %p301 = pneg %p300
      // Predicated region
      $region41: #{bahdanau_attention.1} parent=5 // pred_check
        _
      $region42: #{bahdanau_attention.1} parent=5 // pred_check_branch
        %303 = sbr.rel (%p300) target = $region44
      $region43: #{bahdanau_attention.1} parent=5 // pred_region
        %s304 = ssub.s32 %s24, 1
        %s305 = sand.u32 %s37, 1
        %s306 = scalar_lea.sflag [#allocation3], %s305
        %s307 = sand.u32 %s37, 1
        %s308 = scalar_lea.vmem [#allocation2], %s307
        // Predicated region
        $region45: #{bahdanau_attention.1} parent=43 // pred_check
          %p309 = pneg %p50
        $region46: #{bahdanau_attention.1} parent=43 // pred_check_branch
          %311 = sbr.rel (%p309) target = $region48
        $region47: #{bahdanau_attention.1} parent=43 // pred_region
          %312 = dma.done %s306, 16
        $region48: #{bahdanau_attention.1} parent=43 // pred_fallthru
          _
        %s313 = sand.u32 %s29, 1
        %s314 = scalar_lea.sflag [#allocation6], %s313
        %s315 = sand.u32 %s63, 1
        %s316 = smul.addr %s315, 8
        %s317 = scalar_lea.vmem [#allocation5], %s316
        // Predicated region
        $region49: #{bahdanau_attention.1} parent=43 // pred_check
          %p318 = pneg %p76
        $region50: #{bahdanau_attention.1} parent=43 // pred_check_branch
          %320 = sbr.rel (%p318) target = $region52
        $region51: #{bahdanau_attention.1} parent=43 // pred_region
          %321 = dma.done %s314, 128
        $region52: #{bahdanau_attention.1} parent=43 // pred_fallthru
          _
        // Predicated region
        $region53: #{bahdanau_attention.1} parent=43 // pred_check
          %p322 = pneg %p97
        $region54: #{bahdanau_attention.1} parent=43 // pred_check_branch
          %324 = sbr.rel (%p322) target = $region56
        $region55: #{bahdanau_attention.1} parent=43 // pred_region
          %325 = dma.done [#allocation6], 2048
        $region56: #{bahdanau_attention.1} parent=43 // pred_fallthru
          _
        // Predicated region
        $region57: #{bahdanau_attention.1} parent=43 // pred_check
          %p326 = pneg %p118
        $region58: #{bahdanau_attention.1} parent=43 // pred_check_branch
          %328 = sbr.rel (%p326) target = $region60
        $region59: #{bahdanau_attention.1} parent=43 // pred_region
          %329 = dma.done [#allocation9], 2048
        $region60: #{bahdanau_attention.1} parent=43 // pred_fallthru
          _
        %s330 = sand.u32 %s37, 1
        %s331 = scalar_lea.sflag [#allocation3], %s330
        %s332 = sand.u32 %s37, 1
        %s333 = scalar_lea.vmem [#allocation2], %s332
        %p334 = pneg %p50
        %p335 = pneg %p47
        %s336 = sand.u32 %s29, 1
        %s337 = scalar_lea.sflag [#allocation6], %s336
        %s338 = sand.u32 %s63, 1
        %s339 = smul.addr %s338, 8
        %s340 = scalar_lea.vmem [#allocation5], %s339
        %p341 = pneg %p76
        %p342 = pneg %p73
        %p343 = pneg %p97
        %p344 = pneg %p94
        %p345 = pneg %p118
        %p346 = pneg %p115
        %p347 = pneg %p139
        %p348 = pneg %p136
        %p349 = pneg %p160
        %p350 = pneg %p157
        %p351 = pneg %p186
        %p352 = pneg %p183
        %s353 = sand.u32 %s173, 1
        %s354 = scalar_lea.sflag [#allocation4], %s353
        %s355 = sand.u32 %s173, 1
        %s356 = scalar_lea.vmem [#allocation10], %s355
        %p357 = pneg %p212
        %p358 = pneg %p209
        %p359 = scmp.lt.s32.totalorder %s29, 1
        %s360 = scalar_select %p359, %s29, 1
        %s361 = smul.addr %s360, 8
        %s362 = scalar_lea.vmem %s7, %s361
        %p363 = scmp.lt.s32.totalorder %s29, 1
        %s364 = scalar_select %p363, %s29, 1
        %s365 = smul.addr %s364, 8
        %s366 = scalar_lea.vmem %s7, %s365
        %v367 = vld [vmem:[%s308] sm:$0x1]
        %v368 = vld [vmem:[%s317] sm:$0xff]
        %v369 = vld [vmem:[#allocation7] sm:$0xff]
        %v370 = vld [vmem:[#allocation7 + $0x8] sm:$0xff]
        %v371 = vld [vmem:[#allocation7 + $0x10] sm:$0xff]
        %v372 = vld [vmem:[#allocation7 + $0x18] sm:$0xff]
        %v373 = vld [vmem:[#allocation7 + $0x20] sm:$0xff]
        %v374 = vld [vmem:[#allocation7 + $0x28] sm:$0xff]
        %v375 = vld [vmem:[#allocation7 + $0x30] sm:$0xff]
        %v376 = vld [vmem:[#allocation7 + $0x38] sm:$0xff]
        %v377 = vld [vmem:[#allocation7 + $0x40] sm:$0xff]
        %v378 = vld [vmem:[#allocation7 + $0x48] sm:$0xff]
        %v379 = vld [vmem:[#allocation7 + $0x50] sm:$0xff]
        %v380 = vld [vmem:[#allocation7 + $0x58] sm:$0xff]
        %v381 = vld [vmem:[#allocation7 + $0x60] sm:$0xff]
        %v382 = vld [vmem:[#allocation7 + $0x68] sm:$0xff]
        %v383 = vld [vmem:[#allocation7 + $0x70] sm:$0xff]
        %v384 = vld [vmem:[#allocation7 + $0x78] sm:$0xff]
        %v385 = vld [vmem:[#allocation8] sm:$0xff]
        %v386 = vld [vmem:[#allocation8 + $0x8] sm:$0xff]
        %v387 = vld [vmem:[#allocation8 + $0x10] sm:$0xff]
        %v388 = vld [vmem:[#allocation8 + $0x18] sm:$0xff]
        %v389 = vld [vmem:[#allocation8 + $0x20] sm:$0xff]
        %v390 = vld [vmem:[#allocation8 + $0x28] sm:$0xff]
        %v391 = vld [vmem:[#allocation8 + $0x30] sm:$0xff]
        %v392 = vld [vmem:[#allocation8 + $0x38] sm:$0xff]
        %v393 = vld [vmem:[#allocation8 + $0x40] sm:$0xff]
        %v394 = vld [vmem:[#allocation8 + $0x48] sm:$0xff]
        %v395 = vld [vmem:[#allocation8 + $0x50] sm:$0xff]
        %v396 = vld [vmem:[#allocation8 + $0x58] sm:$0xff]
        %v397 = vld [vmem:[#allocation8 + $0x60] sm:$0xff]
        %v398 = vld [vmem:[#allocation8 + $0x68] sm:$0xff]
        %v399 = vld [vmem:[#allocation8 + $0x70] sm:$0xff]
        %v400 = vld [vmem:[#allocation8 + $0x78] sm:$0xff]
        %v401 = vld [vmem:[%s4] sm:$0x1]
        %402 = vmatprep.subr.mxu0 0.0
        %v403 = vand.u32 %v369, 4294901760
        %404 = vmatpush1.msra.mxu0 %v403
        %405 = vmatprep.subr.mxu0 0.0
        %v406 = vand.u32 %v370, 4294901760
        %407 = vmatpush1.msra.mxu0 %v406
        %408 = vmatprep.subr.mxu0 0.0
        %v409 = vand.u32 %v371, 4294901760
        %410 = vmatpush1.msra.mxu0 %v409
        %411 = vmatprep.subr.mxu0 0.0
        %v412 = vand.u32 %v372, 4294901760
        %413 = vmatpush1.msra.mxu0 %v412
        %414 = vmatprep.subr.mxu0 0.0
        %v415 = vand.u32 %v373, 4294901760
        %416 = vmatpush1.msra.mxu0 %v415
        %417 = vmatprep.subr.mxu0 0.0
        %v418 = vand.u32 %v374, 4294901760
        %419 = vmatpush1.msra.mxu0 %v418
        %420 = vmatprep.subr.mxu0 0.0
        %v421 = vand.u32 %v375, 4294901760
        %422 = vmatpush1.msra.mxu0 %v421
        %423 = vmatprep.subr.mxu0 0.0
        %v424 = vand.u32 %v376, 4294901760
        %425 = vmatpush1.msra.mxu0 %v424
        %426 = vmatprep.subr.mxu0 0.0
        %v427 = vand.u32 %v377, 4294901760
        %428 = vmatpush1.msra.mxu0 %v427
        %429 = vmatprep.subr.mxu0 0.0
        %v430 = vand.u32 %v378, 4294901760
        %431 = vmatpush1.msra.mxu0 %v430
        %432 = vmatprep.subr.mxu0 0.0
        %v433 = vand.u32 %v379, 4294901760
        %434 = vmatpush1.msra.mxu0 %v433
        %435 = vmatprep.subr.mxu0 0.0
        %v436 = vand.u32 %v380, 4294901760
        %437 = vmatpush1.msra.mxu0 %v436
        %438 = vmatprep.subr.mxu0 0.0
        %v439 = vand.u32 %v381, 4294901760
        %440 = vmatpush1.msra.mxu0 %v439
        %441 = vmatprep.subr.mxu0 0.0
        %v442 = vand.u32 %v382, 4294901760
        %443 = vmatpush1.msra.mxu0 %v442
        %444 = vmatprep.subr.mxu0 0.0
        %v445 = vand.u32 %v383, 4294901760
        %446 = vmatpush1.msra.mxu0 %v445
        %447 = vmatprep.subr.mxu0 0.0
        %v448 = vand.u32 %v384, 4294901760
        %449 = vmatpush1.msra.mxu0 %v448
        %450 = vmatprep.subr.mxu0 0.0
        %451 = vmatpush1.msra.mxu0 0.0
        %452 = vmatprep.subr.mxu0 0.0
        %453 = vmatpush1.msra.mxu0 0.0
        %454 = vmatprep.subr.mxu0 0.0
        %455 = vmatpush1.msra.mxu0 0.0
        %456 = vmatprep.subr.mxu0 0.0
        %457 = vmatpush1.msra.mxu0 0.0
        %458 = vmatprep.subr.mxu0 0.0
        %459 = vmatpush1.msra.mxu0 0.0
        %460 = vmatprep.subr.mxu0 0.0
        %461 = vmatpush1.msra.mxu0 0.0
        %462 = vmatprep.subr.mxu0 0.0
        %463 = vmatpush1.msra.mxu0 0.0
        %464 = vmatprep.subr.mxu0 0.0
        %465 = vmatpush1.msra.mxu0 0.0
        %466 = vmatprep.subr.mxu0 0.0
        %467 = vmatpush1.msra.mxu0 0.0
        %468 = vmatprep.subr.mxu0 0.0
        %469 = vmatpush1.msra.mxu0 0.0
        %470 = vmatprep.subr.mxu0 0.0
        %471 = vmatpush1.msra.mxu0 0.0
        %472 = vmatprep.subr.mxu0 0.0
        %473 = vmatpush1.msra.mxu0 0.0
        %474 = vmatprep.subr.mxu0 0.0
        %475 = vmatpush1.msra.mxu0 0.0
        %476 = vmatprep.subr.mxu0 0.0
        %477 = vmatpush1.msra.mxu0 0.0
        %478 = vmatprep.subr.mxu0 0.0
        %479 = vmatpush1.msra.mxu0 0.0
        %480 = vmatprep.subr.mxu0 0.0
        %481 = vmatpush1.msra.mxu0 0.0
        %482 = vmatprep.mubr.f32.mxu0 0.0
        %v483 = vand.u32 %v367, 4294901760
        %v484 = vsub.f32 %v367, %v483
        %v485 = vand.u32 %v484, 4294901760
        %v486 = vsub.f32 %v484, %v485
        %v487 = vand.u32 %v486, 4294901760
        %488 = vmatmul.mubr.f32.gmra.mrb[0].mxu0 %v487
        %v489 = vpop.f32.mrb[0].mxu0
        %v490 = vadd.f32 %v401, %v489
        %v491 = vpop.f32.mrb[0].mxu0
        %492 = vdwg.mxu0
        %493 = vmatprep.subr.mxu0 0.0
        %v494 = vand.u32 %v369, 4294901760
        %v495 = vsub.f32 %v369, %v494
        %v496 = vand.u32 %v495, 4294901760
        %v497 = vsub.f32 %v495, %v496
        %v498 = vand.u32 %v497, 4294901760
        %499 = vmatpush1.msra.mxu0 %v498
        %500 = vmatprep.subr.mxu0 0.0
        %v501 = vand.u32 %v370, 4294901760
        %v502 = vsub.f32 %v370, %v501
        %v503 = vand.u32 %v502, 4294901760
        %v504 = vsub.f32 %v502, %v503
        %v505 = vand.u32 %v504, 4294901760
        %506 = vmatpush1.msra.mxu0 %v505
        %507 = vmatprep.subr.mxu0 0.0
        %v508 = vand.u32 %v371, 4294901760
        %v509 = vsub.f32 %v371, %v508
        %v510 = vand.u32 %v509, 4294901760
        %v511 = vsub.f32 %v509, %v510
        %v512 = vand.u32 %v511, 4294901760
        %513 = vmatpush1.msra.mxu0 %v512
        %514 = vmatprep.subr.mxu0 0.0
        %v515 = vand.u32 %v372, 4294901760
        %v516 = vsub.f32 %v372, %v515
        %v517 = vand.u32 %v516, 4294901760
        %v518 = vsub.f32 %v516, %v517
        %v519 = vand.u32 %v518, 4294901760
        %520 = vmatpush1.msra.mxu0 %v519
        %521 = vmatprep.subr.mxu0 0.0
        %v522 = vand.u32 %v373, 4294901760
        %v523 = vsub.f32 %v373, %v522
        %v524 = vand.u32 %v523, 4294901760
        %v525 = vsub.f32 %v523, %v524
        %v526 = vand.u32 %v525, 4294901760
        %527 = vmatpush1.msra.mxu0 %v526
        %528 = vmatprep.subr.mxu0 0.0
        %v529 = vand.u32 %v374, 4294901760
        %v530 = vsub.f32 %v374, %v529
        %v531 = vand.u32 %v530, 4294901760
        %v532 = vsub.f32 %v530, %v531
        %v533 = vand.u32 %v532, 4294901760
        %534 = vmatpush1.msra.mxu0 %v533
        %535 = vmatprep.subr.mxu0 0.0
        %v536 = vand.u32 %v375, 4294901760
        %v537 = vsub.f32 %v375, %v536
        %v538 = vand.u32 %v537, 4294901760
        %v539 = vsub.f32 %v537, %v538
        %v540 = vand.u32 %v539, 4294901760
        %541 = vmatpush1.msra.mxu0 %v540
        %542 = vmatprep.subr.mxu0 0.0
        %v543 = vand.u32 %v376, 4294901760
        %v544 = vsub.f32 %v376, %v543
        %v545 = vand.u32 %v544, 4294901760
        %v546 = vsub.f32 %v544, %v545
        %v547 = vand.u32 %v546, 4294901760
        %548 = vmatpush1.msra.mxu0 %v547
        %549 = vmatprep.subr.mxu0 0.0
        %v550 = vand.u32 %v377, 4294901760
        %v551 = vsub.f32 %v377, %v550
        %v552 = vand.u32 %v551, 4294901760
        %v553 = vsub.f32 %v551, %v552
        %v554 = vand.u32 %v553, 4294901760
        %555 = vmatpush1.msra.mxu0 %v554
        %556 = vmatprep.subr.mxu0 0.0
        %v557 = vand.u32 %v378, 4294901760
        %v558 = vsub.f32 %v378, %v557
        %v559 = vand.u32 %v558, 4294901760
        %v560 = vsub.f32 %v558, %v559
        %v561 = vand.u32 %v560, 4294901760
        %562 = vmatpush1.msra.mxu0 %v561
        %563 = vmatprep.subr.mxu0 0.0
        %v564 = vand.u32 %v379, 4294901760
        %v565 = vsub.f32 %v379, %v564
        %v566 = vand.u32 %v565, 4294901760
        %v567 = vsub.f32 %v565, %v566
        %v568 = vand.u32 %v567, 4294901760
        %569 = vmatpush1.msra.mxu0 %v568
        %570 = vmatprep.subr.mxu0 0.0
        %v571 = vand.u32 %v380, 4294901760
        %v572 = vsub.f32 %v380, %v571
        %v573 = vand.u32 %v572, 4294901760
        %v574 = vsub.f32 %v572, %v573
        %v575 = vand.u32 %v574, 4294901760
        %576 = vmatpush1.msra.mxu0 %v575
        %577 = vmatprep.subr.mxu0 0.0
        %v578 = vand.u32 %v381, 4294901760
        %v579 = vsub.f32 %v381, %v578
        %v580 = vand.u32 %v579, 4294901760
        %v581 = vsub.f32 %v579, %v580
        %v582 = vand.u32 %v581, 4294901760
        %583 = vmatpush1.msra.mxu0 %v582
        %584 = vmatprep.subr.mxu0 0.0
        %v585 = vand.u32 %v382, 4294901760
        %v586 = vsub.f32 %v382, %v585
        %v587 = vand.u32 %v586, 4294901760
        %v588 = vsub.f32 %v586, %v587
        %v589 = vand.u32 %v588, 4294901760
        %590 = vmatpush1.msra.mxu0 %v589
        %591 = vmatprep.subr.mxu0 0.0
        %v592 = vand.u32 %v383, 4294901760
        %v593 = vsub.f32 %v383, %v592
        %v594 = vand.u32 %v593, 4294901760
        %v595 = vsub.f32 %v593, %v594
        %v596 = vand.u32 %v595, 4294901760
        %597 = vmatpush1.msra.mxu0 %v596
        %598 = vmatprep.subr.mxu0 0.0
        %v599 = vand.u32 %v384, 4294901760
        %v600 = vsub.f32 %v384, %v599
        %v601 = vand.u32 %v600, 4294901760
        %v602 = vsub.f32 %v600, %v601
        %v603 = vand.u32 %v602, 4294901760
        %604 = vmatpush1.msra.mxu0 %v603
        %605 = vmatprep.subr.mxu0 0.0
        %606 = vmatpush1.msra.mxu0 0.0
        %607 = vmatprep.subr.mxu0 0.0
        %608 = vmatpush1.msra.mxu0 0.0
        %609 = vmatprep.subr.mxu0 0.0
        %610 = vmatpush1.msra.mxu0 0.0
        %611 = vmatprep.subr.mxu0 0.0
        %612 = vmatpush1.msra.mxu0 0.0
        %613 = vmatprep.subr.mxu0 0.0
        %614 = vmatpush1.msra.mxu0 0.0
        %615 = vmatprep.subr.mxu0 0.0
        %616 = vmatpush1.msra.mxu0 0.0
        %617 = vmatprep.subr.mxu0 0.0
        %618 = vmatpush1.msra.mxu0 0.0
        %619 = vmatprep.subr.mxu0 0.0
        %620 = vmatpush1.msra.mxu0 0.0
        %621 = vmatprep.subr.mxu0 0.0
        %622 = vmatpush1.msra.mxu0 0.0
        %623 = vmatprep.subr.mxu0 0.0
        %624 = vmatpush1.msra.mxu0 0.0
        %625 = vmatprep.subr.mxu0 0.0
        %626 = vmatpush1.msra.mxu0 0.0
        %627 = vmatprep.subr.mxu0 0.0
        %628 = vmatpush1.msra.mxu0 0.0
        %629 = vmatprep.subr.mxu0 0.0
        %630 = vmatpush1.msra.mxu0 0.0
        %631 = vmatprep.subr.mxu0 0.0
        %632 = vmatpush1.msra.mxu0 0.0
        %633 = vmatprep.subr.mxu0 0.0
        %634 = vmatpush1.msra.mxu0 0.0
        %635 = vmatprep.subr.mxu0 0.0
        %636 = vmatpush1.msra.mxu0 0.0
        %637 = vmatprep.mubr.f32.mxu0 0.0
        %v638 = vand.u32 %v367, 4294901760
        %639 = vmatmul.mubr.f32.gmra.mrb[0].mxu0 %v638
        %v640 = vpop.f32.mrb[0].mxu0
        %v641 = vadd.f32 %v490, %v640
        %v642 = vpop.f32.mrb[0].mxu0
        %643 = vdwg.mxu0
        %644 = vmatprep.subr.mxu0 0.0
        %v645 = vand.u32 %v369, 4294901760
        %v646 = vsub.f32 %v369, %v645
        %647 = vmatpush1.msra.mxu0 %v646
        %648 = vmatprep.subr.mxu0 0.0
        %v649 = vand.u32 %v370, 4294901760
        %v650 = vsub.f32 %v370, %v649
        %651 = vmatpush1.msra.mxu0 %v650
        %652 = vmatprep.subr.mxu0 0.0
        %v653 = vand.u32 %v371, 4294901760
        %v654 = vsub.f32 %v371, %v653
        %655 = vmatpush1.msra.mxu0 %v654
        %656 = vmatprep.subr.mxu0 0.0
        %v657 = vand.u32 %v372, 4294901760
        %v658 = vsub.f32 %v372, %v657
        %659 = vmatpush1.msra.mxu0 %v658
        %660 = vmatprep.subr.mxu0 0.0
        %v661 = vand.u32 %v373, 4294901760
        %v662 = vsub.f32 %v373, %v661
        %663 = vmatpush1.msra.mxu0 %v662
        %664 = vmatprep.subr.mxu0 0.0
        %v665 = vand.u32 %v374, 4294901760
        %v666 = vsub.f32 %v374, %v665
        %667 = vmatpush1.msra.mxu0 %v666
        %668 = vmatprep.subr.mxu0 0.0
        %v669 = vand.u32 %v375, 4294901760
        %v670 = vsub.f32 %v375, %v669
        %671 = vmatpush1.msra.mxu0 %v670
        %672 = vmatprep.subr.mxu0 0.0
        %v673 = vand.u32 %v376, 4294901760
        %v674 = vsub.f32 %v376, %v673
        %675 = vmatpush1.msra.mxu0 %v674
        %676 = vmatprep.subr.mxu0 0.0
        %v677 = vand.u32 %v377, 4294901760
        %v678 = vsub.f32 %v377, %v677
        %679 = vmatpush1.msra.mxu0 %v678
        %680 = vmatprep.subr.mxu0 0.0
        %v681 = vand.u32 %v378, 4294901760
        %v682 = vsub.f32 %v378, %v681
        %683 = vmatpush1.msra.mxu0 %v682
        %684 = vmatprep.subr.mxu0 0.0
        %v685 = vand.u32 %v379, 4294901760
        %v686 = vsub.f32 %v379, %v685
        %687 = vmatpush1.msra.mxu0 %v686
        %688 = vmatprep.subr.mxu0 0.0
        %v689 = vand.u32 %v380, 4294901760
        %v690 = vsub.f32 %v380, %v689
        %691 = vmatpush1.msra.mxu0 %v690
        %692 = vmatprep.subr.mxu0 0.0
        %v693 = vand.u32 %v381, 4294901760
        %v694 = vsub.f32 %v381, %v693
        %695 = vmatpush1.msra.mxu0 %v694
        %696 = vmatprep.subr.mxu0 0.0
        %v697 = vand.u32 %v382, 4294901760
        %v698 = vsub.f32 %v382, %v697
        %699 = vmatpush1.msra.mxu0 %v698
        %700 = vmatprep.subr.mxu0 0.0
        %v701 = vand.u32 %v383, 4294901760
        %v702 = vsub.f32 %v383, %v701
        %703 = vmatpush1.msra.mxu0 %v702
        %704 = vmatprep.subr.mxu0 0.0
        %v705 = vand.u32 %v384, 4294901760
        %v706 = vsub.f32 %v384, %v705
        %707 = vmatpush1.msra.mxu0 %v706
        %708 = vmatprep.subr.mxu0 0.0
        %709 = vmatpush1.msra.mxu0 0.0
        %710 = vmatprep.subr.mxu0 0.0
        %711 = vmatpush1.msra.mxu0 0.0
        %712 = vmatprep.subr.mxu0 0.0
        %713 = vmatpush1.msra.mxu0 0.0
        %714 = vmatprep.subr.mxu0 0.0
        %715 = vmatpush1.msra.mxu0 0.0
        %716 = vmatprep.subr.mxu0 0.0
        %717 = vmatpush1.msra.mxu0 0.0
        %718 = vmatprep.subr.mxu0 0.0
        %719 = vmatpush1.msra.mxu0 0.0
        %720 = vmatprep.subr.mxu0 0.0
        %721 = vmatpush1.msra.mxu0 0.0
        %722 = vmatprep.subr.mxu0 0.0
        %723 = vmatpush1.msra.mxu0 0.0
        %724 = vmatprep.subr.mxu0 0.0
        %725 = vmatpush1.msra.mxu0 0.0
        %726 = vmatprep.subr.mxu0 0.0
        %727 = vmatpush1.msra.mxu0 0.0
        %728 = vmatprep.subr.mxu0 0.0
        %729 = vmatpush1.msra.mxu0 0.0
        %730 = vmatprep.subr.mxu0 0.0
        %731 = vmatpush1.msra.mxu0 0.0
        %732 = vmatprep.subr.mxu0 0.0
        %733 = vmatpush1.msra.mxu0 0.0
        %734 = vmatprep.subr.mxu0 0.0
        %735 = vmatpush1.msra.mxu0 0.0
        %736 = vmatprep.subr.mxu0 0.0
        %737 = vmatpush1.msra.mxu0 0.0
        %738 = vmatprep.subr.mxu0 0.0
        %739 = vmatpush1.msra.mxu0 0.0
        %740 = vmatprep.mubr.f32.mxu0 0.0
        %v741 = vand.u32 %v367, 4294901760
        %v742 = vsub.f32 %v367, %v741
        %743 = vmatmul.mubr.f32.gmra.mrb[0].mxu0 %v742
        %v744 = vpop.f32.mrb[0].mxu0
        %v745 = vadd.f32 %v641, %v744
        %v746 = vpop.f32.mrb[0].mxu0
        %747 = vdwg.mxu0
        %748 = vmatprep.subr.mxu0 0.0
        %v749 = vand.u32 %v369, 4294901760
        %750 = vmatpush1.msra.mxu0 %v749
        %751 = vmatprep.subr.mxu0 0.0
        %v752 = vand.u32 %v370, 4294901760
        %753 = vmatpush1.msra.mxu0 %v752
        %754 = vmatprep.subr.mxu0 0.0
        %v755 = vand.u32 %v371, 4294901760
        %756 = vmatpush1.msra.mxu0 %v755
        %757 = vmatprep.subr.mxu0 0.0
        %v758 = vand.u32 %v372, 4294901760
        %759 = vmatpush1.msra.mxu0 %v758
        %760 = vmatprep.subr.mxu0 0.0
        %v761 = vand.u32 %v373, 4294901760
        %762 = vmatpush1.msra.mxu0 %v761
        %763 = vmatprep.subr.mxu0 0.0
        %v764 = vand.u32 %v374, 4294901760
        %765 = vmatpush1.msra.mxu0 %v764
        %766 = vmatprep.subr.mxu0 0.0
        %v767 = vand.u32 %v375, 4294901760
        %768 = vmatpush1.msra.mxu0 %v767
        %769 = vmatprep.subr.mxu0 0.0
        %v770 = vand.u32 %v376, 4294901760
        %771 = vmatpush1.msra.mxu0 %v770
        %772 = vmatprep.subr.mxu0 0.0
        %v773 = vand.u32 %v377, 4294901760
        %774 = vmatpush1.msra.mxu0 %v773
        %775 = vmatprep.subr.mxu0 0.0
        %v776 = vand.u32 %v378, 4294901760
        %777 = vmatpush1.msra.mxu0 %v776
        %778 = vmatprep.subr.mxu0 0.0
        %v779 = vand.u32 %v379, 4294901760
        %780 = vmatpush1.msra.mxu0 %v779
        %781 = vmatprep.subr.mxu0 0.0
        %v782 = vand.u32 %v380, 4294901760
        %783 = vmatpush1.msra.mxu0 %v782
        %784 = vmatprep.subr.mxu0 0.0
        %v785 = vand.u32 %v381, 4294901760
        %786 = vmatpush1.msra.mxu0 %v785
        %787 = vmatprep.subr.mxu0 0.0
        %v788 = vand.u32 %v382, 4294901760
        %789 = vmatpush1.msra.mxu0 %v788
        %790 = vmatprep.subr.mxu0 0.0
        %v791 = vand.u32 %v383, 4294901760
        %792 = vmatpush1.msra.mxu0 %v791
        %793 = vmatprep.subr.mxu0 0.0
        %v794 = vand.u32 %v384, 4294901760
        %795 = vmatpush1.msra.mxu0 %v794
        %796 = vmatprep.subr.mxu0 0.0
        %797 = vmatpush1.msra.mxu0 0.0
        %798 = vmatprep.subr.mxu0 0.0
        %799 = vmatpush1.msra.mxu0 0.0
        %800 = vmatprep.subr.mxu0 0.0
        %801 = vmatpush1.msra.mxu0 0.0
        %802 = vmatprep.subr.mxu0 0.0
        %803 = vmatpush1.msra.mxu0 0.0
        %804 = vmatprep.subr.mxu0 0.0
        %805 = vmatpush1.msra.mxu0 0.0
        %806 = vmatprep.subr.mxu0 0.0
        %807 = vmatpush1.msra.mxu0 0.0
        %808 = vmatprep.subr.mxu0 0.0
        %809 = vmatpush1.msra.mxu0 0.0
        %810 = vmatprep.subr.mxu0 0.0
        %811 = vmatpush1.msra.mxu0 0.0
        %812 = vmatprep.subr.mxu0 0.0
        %813 = vmatpush1.msra.mxu0 0.0
        %814 = vmatprep.subr.mxu0 0.0
        %815 = vmatpush1.msra.mxu0 0.0
        %816 = vmatprep.subr.mxu0 0.0
        %817 = vmatpush1.msra.mxu0 0.0
        %818 = vmatprep.subr.mxu0 0.0
        %819 = vmatpush1.msra.mxu0 0.0
        %820 = vmatprep.subr.mxu0 0.0
        %821 = vmatpush1.msra.mxu0 0.0
        %822 = vmatprep.subr.mxu0 0.0
        %823 = vmatpush1.msra.mxu0 0.0
        %824 = vmatprep.subr.mxu0 0.0
        %825 = vmatpush1.msra.mxu0 0.0
        %826 = vmatprep.subr.mxu0 0.0
        %827 = vmatpush1.msra.mxu0 0.0
        %828 = vmatprep.mubr.f32.mxu0 0.0
        %v829 = vand.u32 %v367, 4294901760
        %v830 = vsub.f32 %v367, %v829
        %v831 = vand.u32 %v830, 4294901760
        %832 = vmatmul.mubr.f32.gmra.mrb[0].mxu0 %v831
        %v833 = vpop.f32.mrb[0].mxu0
        %v834 = vadd.f32 %v745, %v833
        %v835 = vpop.f32.mrb[0].mxu0
        %836 = vdwg.mxu0
        %837 = vmatprep.subr.mxu0 0.0
        %v838 = vand.u32 %v369, 4294901760
        %v839 = vsub.f32 %v369, %v838
        %v840 = vand.u32 %v839, 4294901760
        %841 = vmatpush1.msra.mxu0 %v840
        %842 = vmatprep.subr.mxu0 0.0
        %v843 = vand.u32 %v370, 4294901760
        %v844 = vsub.f32 %v370, %v843
        %v845 = vand.u32 %v844, 4294901760
        %846 = vmatpush1.msra.mxu0 %v845
        %847 = vmatprep.subr.mxu0 0.0
        %v848 = vand.u32 %v371, 4294901760
        %v849 = vsub.f32 %v371, %v848
        %v850 = vand.u32 %v849, 4294901760
        %851 = vmatpush1.msra.mxu0 %v850
        %852 = vmatprep.subr.mxu0 0.0
        %v853 = vand.u32 %v372, 4294901760
        %v854 = vsub.f32 %v372, %v853
        %v855 = vand.u32 %v854, 4294901760
        %856 = vmatpush1.msra.mxu0 %v855
        %857 = vmatprep.subr.mxu0 0.0
        %v858 = vand.u32 %v373, 4294901760
        %v859 = vsub.f32 %v373, %v858
        %v860 = vand.u32 %v859, 4294901760
        %861 = vmatpush1.msra.mxu0 %v860
        %862 = vmatprep.subr.mxu0 0.0
        %v863 = vand.u32 %v374, 4294901760
        %v864 = vsub.f32 %v374, %v863
        %v865 = vand.u32 %v864, 4294901760
        %866 = vmatpush1.msra.mxu0 %v865
        %867 = vmatprep.subr.mxu0 0.0
        %v868 = vand.u32 %v375, 4294901760
        %v869 = vsub.f32 %v375, %v868
        %v870 = vand.u32 %v869, 4294901760
        %871 = vmatpush1.msra.mxu0 %v870
        %872 = vmatprep.subr.mxu0 0.0
        %v873 = vand.u32 %v376, 4294901760
        %v874 = vsub.f32 %v376, %v873
        %v875 = vand.u32 %v874, 4294901760
        %876 = vmatpush1.msra.mxu0 %v875
        %877 = vmatprep.subr.mxu0 0.0
        %v878 = vand.u32 %v377, 4294901760
        %v879 = vsub.f32 %v377, %v878
        %v880 = vand.u32 %v879, 4294901760
        %881 = vmatpush1.msra.mxu0 %v880
        %882 = vmatprep.subr.mxu0 0.0
        %v883 = vand.u32 %v378, 4294901760
        %v884 = vsub.f32 %v378, %v883
        %v885 = vand.u32 %v884, 4294901760
        %886 = vmatpush1.msra.mxu0 %v885
        %887 = vmatprep.subr.mxu0 0.0
        %v888 = vand.u32 %v379, 4294901760
        %v889 = vsub.f32 %v379, %v888
        %v890 = vand.u32 %v889, 4294901760
        %891 = vmatpush1.msra.mxu0 %v890
        %892 = vmatprep.subr.mxu0 0.0
        %v893 = vand.u32 %v380, 4294901760
        %v894 = vsub.f32 %v380, %v893
        %v895 = vand.u32 %v894, 4294901760
        %896 = vmatpush1.msra.mxu0 %v895
        %897 = vmatprep.subr.mxu0 0.0
        %v898 = vand.u32 %v381, 4294901760
        %v899 = vsub.f32 %v381, %v898
        %v900 = vand.u32 %v899, 4294901760
        %901 = vmatpush1.msra.mxu0 %v900
        %902 = vmatprep.subr.mxu0 0.0
        %v903 = vand.u32 %v382, 4294901760
        %v904 = vsub.f32 %v382, %v903
        %v905 = vand.u32 %v904, 4294901760
        %906 = vmatpush1.msra.mxu0 %v905
        %907 = vmatprep.subr.mxu0 0.0
        %v908 = vand.u32 %v383, 4294901760
        %v909 = vsub.f32 %v383, %v908
        %v910 = vand.u32 %v909, 4294901760
        %911 = vmatpush1.msra.mxu0 %v910
        %912 = vmatprep.subr.mxu0 0.0
        %v913 = vand.u32 %v384, 4294901760
        %v914 = vsub.f32 %v384, %v913
        %v915 = vand.u32 %v914, 4294901760
        %916 = vmatpush1.msra.mxu0 %v915
        %917 = vmatprep.subr.mxu0 0.0
        %918 = vmatpush1.msra.mxu0 0.0
        %919 = vmatprep.subr.mxu0 0.0
        %920 = vmatpush1.msra.mxu0 0.0
        %921 = vmatprep.subr.mxu0 0.0
        %922 = vmatpush1.msra.mxu0 0.0
        %923 = vmatprep.subr.mxu0 0.0
        %924 = vmatpush1.msra.mxu0 0.0
        %925 = vmatprep.subr.mxu0 0.0
        %926 = vmatpush1.msra.mxu0 0.0
        %927 = vmatprep.subr.mxu0 0.0
        %928 = vmatpush1.msra.mxu0 0.0
        %929 = vmatprep.subr.mxu0 0.0
        %930 = vmatpush1.msra.mxu0 0.0
        %931 = vmatprep.subr.mxu0 0.0
        %932 = vmatpush1.msra.mxu0 0.0
        %933 = vmatprep.subr.mxu0 0.0
        %934 = vmatpush1.msra.mxu0 0.0
        %935 = vmatprep.subr.mxu0 0.0
        %936 = vmatpush1.msra.mxu0 0.0
        %937 = vmatprep.subr.mxu0 0.0
        %938 = vmatpush1.msra.mxu0 0.0
        %939 = vmatprep.subr.mxu0 0.0
        %940 = vmatpush1.msra.mxu0 0.0
        %941 = vmatprep.subr.mxu0 0.0
        %942 = vmatpush1.msra.mxu0 0.0
        %943 = vmatprep.subr.mxu0 0.0
        %944 = vmatpush1.msra.mxu0 0.0
        %945 = vmatprep.subr.mxu0 0.0
        %946 = vmatpush1.msra.mxu0 0.0
        %947 = vmatprep.subr.mxu0 0.0
        %948 = vmatpush1.msra.mxu0 0.0
        %949 = vmatprep.mubr.f32.mxu0 0.0
        %v950 = vand.u32 %v367, 4294901760
        %951 = vmatmul.mubr.f32.gmra.mrb[0].mxu0 %v950
        %v952 = vpop.f32.mrb[0].mxu0
        %v953 = vadd.f32 %v834, %v952
        %v954 = vpop.f32.mrb[0].mxu0
        %955 = vdwg.mxu0
        %956 = vmatprep.subr.mxu0 0.0
        %v957 = vand.u32 %v369, 4294901760
        %958 = vmatpush1.msra.mxu0 %v957
        %959 = vmatprep.subr.mxu0 0.0
        %v960 = vand.u32 %v370, 4294901760
        %961 = vmatpush1.msra.mxu0 %v960
        %962 = vmatprep.subr.mxu0 0.0
        %v963 = vand.u32 %v371, 4294901760
        %964 = vmatpush1.msra.mxu0 %v963
        %965 = vmatprep.subr.mxu0 0.0
        %v966 = vand.u32 %v372, 4294901760
        %967 = vmatpush1.msra.mxu0 %v966
        %968 = vmatprep.subr.mxu0 0.0
        %v969 = vand.u32 %v373, 4294901760
        %970 = vmatpush1.msra.mxu0 %v969
        %971 = vmatprep.subr.mxu0 0.0
        %v972 = vand.u32 %v374, 4294901760
        %973 = vmatpush1.msra.mxu0 %v972
        %974 = vmatprep.subr.mxu0 0.0
        %v975 = vand.u32 %v375, 4294901760
        %976 = vmatpush1.msra.mxu0 %v975
        %977 = vmatprep.subr.mxu0 0.0
        %v978 = vand.u32 %v376, 4294901760
        %979 = vmatpush1.msra.mxu0 %v978
        %980 = vmatprep.subr.mxu0 0.0
        %v981 = vand.u32 %v377, 4294901760
        %982 = vmatpush1.msra.mxu0 %v981
        %983 = vmatprep.subr.mxu0 0.0
        %v984 = vand.u32 %v378, 4294901760
        %985 = vmatpush1.msra.mxu0 %v984
        %986 = vmatprep.subr.mxu0 0.0
        %v987 = vand.u32 %v379, 4294901760
        %988 = vmatpush1.msra.mxu0 %v987
        %989 = vmatprep.subr.mxu0 0.0
        %v990 = vand.u32 %v380, 4294901760
        %991 = vmatpush1.msra.mxu0 %v990
        %992 = vmatprep.subr.mxu0 0.0
        %v993 = vand.u32 %v381, 4294901760
        %994 = vmatpush1.msra.mxu0 %v993
        %995 = vmatprep.subr.mxu0 0.0
        %v996 = vand.u32 %v382, 4294901760
        %997 = vmatpush1.msra.mxu0 %v996
        %998 = vmatprep.subr.mxu0 0.0
        %v999 = vand.u32 %v383, 4294901760
        %1000 = vmatpush1.msra.mxu0 %v999
        %1001 = vmatprep.subr.mxu0 0.0
        %v1002 = vand.u32 %v384, 4294901760
        %1003 = vmatpush1.msra.mxu0 %v1002
        %1004 = vmatprep.subr.mxu0 0.0
        %1005 = vmatpush1.msra.mxu0 0.0
        %1006 = vmatprep.subr.mxu0 0.0
        %1007 = vmatpush1.msra.mxu0 0.0
        %1008 = vmatprep.subr.mxu0 0.0
        %1009 = vmatpush1.msra.mxu0 0.0
        %1010 = vmatprep.subr.mxu0 0.0
        %1011 = vmatpush1.msra.mxu0 0.0
        %1012 = vmatprep.subr.mxu0 0.0
        %1013 = vmatpush1.msra.mxu0 0.0
        %1014 = vmatprep.subr.mxu0 0.0
        %1015 = vmatpush1.msra.mxu0 0.0
        %1016 = vmatprep.subr.mxu0 0.0
        %1017 = vmatpush1.msra.mxu0 0.0
        %1018 = vmatprep.subr.mxu0 0.0
        %1019 = vmatpush1.msra.mxu0 0.0
        %1020 = vmatprep.subr.mxu0 0.0
        %1021 = vmatpush1.msra.mxu0 0.0
        %1022 = vmatprep.subr.mxu0 0.0
        %1023 = vmatpush1.msra.mxu0 0.0
        %1024 = vmatprep.subr.mxu0 0.0
        %1025 = vmatpush1.msra.mxu0 0.0
        %1026 = vmatprep.subr.mxu0 0.0
        %1027 = vmatpush1.msra.mxu0 0.0
        %1028 = vmatprep.subr.mxu0 0.0
        %1029 = vmatpush1.msra.mxu0 0.0
        %1030 = vmatprep.subr.mxu0 0.0
        %1031 = vmatpush1.msra.mxu0 0.0
        %1032 = vmatprep.subr.mxu0 0.0
        %1033 = vmatpush1.msra.mxu0 0.0
        %1034 = vmatprep.subr.mxu0 0.0
        %1035 = vmatpush1.msra.mxu0 0.0
        %1036 = vmatprep.mubr.f32.mxu0 0.0
        %v1037 = vand.u32 %v367, 4294901760
        %1038 = vmatmul.mubr.f32.gmra.mrb[0].mxu0 %v1037
        %v1039 = vpop.f32.mrb[0].mxu0
        %v1040 = vadd.f32 %v953, %v1039
        %v1041 = vpop.f32.mrb[0].mxu0
        %1042 = vdwg.mxu0
        %v1043 = vlaneseq
        %v1044 = vshrl.u32 %v1043, 7
        %v1045 = vsub.s32 0, %v1044
        %v1046 = vrot.slane %v1040, %v1045
        %1047 = vmatprep.subr.mxu0 0.0
        %v1048 = vand.u32 %v385, 4294901760
        %1049 = vmatpush1.msra.mxu0 %v1048
        %1050 = vmatprep.subr.mxu0 0.0
        %v1051 = vand.u32 %v386, 4294901760
        %1052 = vmatpush1.msra.mxu0 %v1051
        %1053 = vmatprep.subr.mxu0 0.0
        %v1054 = vand.u32 %v387, 4294901760
        %1055 = vmatpush1.msra.mxu0 %v1054
        %1056 = vmatprep.subr.mxu0 0.0
        %v1057 = vand.u32 %v388, 4294901760
        %1058 = vmatpush1.msra.mxu0 %v1057
        %1059 = vmatprep.subr.mxu0 0.0
        %v1060 = vand.u32 %v389, 4294901760
        %1061 = vmatpush1.msra.mxu0 %v1060
        %1062 = vmatprep.subr.mxu0 0.0
        %v1063 = vand.u32 %v390, 4294901760
        %1064 = vmatpush1.msra.mxu0 %v1063
        %1065 = vmatprep.subr.mxu0 0.0
        %v1066 = vand.u32 %v391, 4294901760
        %1067 = vmatpush1.msra.mxu0 %v1066
        %1068 = vmatprep.subr.mxu0 0.0
        %v1069 = vand.u32 %v392, 4294901760
        %1070 = vmatpush1.msra.mxu0 %v1069
        %1071 = vmatprep.subr.mxu0 0.0
        %v1072 = vand.u32 %v393, 4294901760
        %1073 = vmatpush1.msra.mxu0 %v1072
        %1074 = vmatprep.subr.mxu0 0.0
        %v1075 = vand.u32 %v394, 4294901760
        %1076 = vmatpush1.msra.mxu0 %v1075
        %1077 = vmatprep.subr.mxu0 0.0
        %v1078 = vand.u32 %v395, 4294901760
        %1079 = vmatpush1.msra.mxu0 %v1078
        %1080 = vmatprep.subr.mxu0 0.0
        %v1081 = vand.u32 %v396, 4294901760
        %1082 = vmatpush1.msra.mxu0 %v1081
        %1083 = vmatprep.subr.mxu0 0.0
        %v1084 = vand.u32 %v397, 4294901760
        %1085 = vmatpush1.msra.mxu0 %v1084
        %1086 = vmatprep.subr.mxu0 0.0
        %v1087 = vand.u32 %v398, 4294901760
        %1088 = vmatpush1.msra.mxu0 %v1087
        %1089 = vmatprep.subr.mxu0 0.0
        %v1090 = vand.u32 %v399, 4294901760
        %1091 = vmatpush1.msra.mxu0 %v1090
        %1092 = vmatprep.subr.mxu0 0.0
        %v1093 = vand.u32 %v400, 4294901760
        %1094 = vmatpush1.msra.mxu0 %v1093
        %1095 = vmatprep.subr.mxu0 0.0
        %1096 = vmatpush1.msra.mxu0 0.0
        %1097 = vmatprep.subr.mxu0 0.0
        %1098 = vmatpush1.msra.mxu0 0.0
        %1099 = vmatprep.subr.mxu0 0.0
        %1100 = vmatpush1.msra.mxu0 0.0
        %1101 = vmatprep.subr.mxu0 0.0
        %1102 = vmatpush1.msra.mxu0 0.0
        %1103 = vmatprep.subr.mxu0 0.0
        %1104 = vmatpush1.msra.mxu0 0.0
        %1105 = vmatprep.subr.mxu0 0.0
        %1106 = vmatpush1.msra.mxu0 0.0
        %1107 = vmatprep.subr.mxu0 0.0
        %1108 = vmatpush1.msra.mxu0 0.0
        %1109 = vmatprep.subr.mxu0 0.0
        %1110 = vmatpush1.msra.mxu0 0.0
        %1111 = vmatprep.subr.mxu0 0.0
        %1112 = vmatpush1.msra.mxu0 0.0
        %1113 = vmatprep.subr.mxu0 0.0
        %1114 = vmatpush1.msra.mxu0 0.0
        %1115 = vmatprep.subr.mxu0 0.0
        %1116 = vmatpush1.msra.mxu0 0.0
        %1117 = vmatprep.subr.mxu0 0.0
        %1118 = vmatpush1.msra.mxu0 0.0
        %1119 = vmatprep.subr.mxu0 0.0
        %1120 = vmatpush1.msra.mxu0 0.0
        %1121 = vmatprep.subr.mxu0 0.0
        %1122 = vmatpush1.msra.mxu0 0.0
        %1123 = vmatprep.subr.mxu0 0.0
        %1124 = vmatpush1.msra.mxu0 0.0
        %1125 = vmatprep.subr.mxu0 0.0
        %1126 = vmatpush1.msra.mxu0 0.0
        %1127 = vmatprep.mubr.f32.mxu0 0.0
        %v1128 = vand.u32 %v368, 4294901760
        %v1129 = vsub.f32 %v368, %v1128
        %v1130 = vand.u32 %v1129, 4294901760
        %v1131 = vsub.f32 %v1129, %v1130
        %v1132 = vand.u32 %v1131, 4294901760
        %1133 = vmatmul.mubr.f32.gmra.mrb[0].mxu0 %v1132
        %v1134 = vpop.f32.mrb[0].mxu0
        %v1135 = vadd.f32 %v1046, %v1134
        %v1136 = vpop.f32.mrb[0].mxu0
        %1137 = vdwg.mxu0
        %1138 = vmatprep.subr.mxu0 0.0
        %v1139 = vand.u32 %v385, 4294901760
        %v1140 = vsub.f32 %v385, %v1139
        %v1141 = vand.u32 %v1140, 4294901760
        %v1142 = vsub.f32 %v1140, %v1141
        %v1143 = vand.u32 %v1142, 4294901760
        %1144 = vmatpush1.msra.mxu0 %v1143
        %1145 = vmatprep.subr.mxu0 0.0
        %v1146 = vand.u32 %v386, 4294901760
        %v1147 = vsub.f32 %v386, %v1146
        %v1148 = vand.u32 %v1147, 4294901760
        %v1149 = vsub.f32 %v1147, %v1148
        %v1150 = vand.u32 %v1149, 4294901760
        %1151 = vmatpush1.msra.mxu0 %v1150
        %1152 = vmatprep.subr.mxu0 0.0
        %v1153 = vand.u32 %v387, 4294901760
        %v1154 = vsub.f32 %v387, %v1153
        %v1155 = vand.u32 %v1154, 4294901760
        %v1156 = vsub.f32 %v1154, %v1155
        %v1157 = vand.u32 %v1156, 4294901760
        %1158 = vmatpush1.msra.mxu0 %v1157
        %1159 = vmatprep.subr.mxu0 0.0
        %v1160 = vand.u32 %v388, 4294901760
        %v1161 = vsub.f32 %v388, %v1160
        %v1162 = vand.u32 %v1161, 4294901760
        %v1163 = vsub.f32 %v1161, %v1162
        %v1164 = vand.u32 %v1163, 4294901760
        %1165 = vmatpush1.msra.mxu0 %v1164
        %1166 = vmatprep.subr.mxu0 0.0
        %v1167 = vand.u32 %v389, 4294901760
        %v1168 = vsub.f32 %v389, %v1167
        %v1169 = vand.u32 %v1168, 4294901760
        %v1170 = vsub.f32 %v1168, %v1169
        %v1171 = vand.u32 %v1170, 4294901760
        %1172 = vmatpush1.msra.mxu0 %v1171
        %1173 = vmatprep.subr.mxu0 0.0
        %v1174 = vand.u32 %v390, 4294901760
        %v1175 = vsub.f32 %v390, %v1174
        %v1176 = vand.u32 %v1175, 4294901760
        %v1177 = vsub.f32 %v1175, %v1176
        %v1178 = vand.u32 %v1177, 4294901760
        %1179 = vmatpush1.msra.mxu0 %v1178
        %1180 = vmatprep.subr.mxu0 0.0
        %v1181 = vand.u32 %v391, 4294901760
        %v1182 = vsub.f32 %v391, %v1181
        %v1183 = vand.u32 %v1182, 4294901760
        %v1184 = vsub.f32 %v1182, %v1183
        %v1185 = vand.u32 %v1184, 4294901760
        %1186 = vmatpush1.msra.mxu0 %v1185
        %1187 = vmatprep.subr.mxu0 0.0
        %v1188 = vand.u32 %v392, 4294901760
        %v1189 = vsub.f32 %v392, %v1188
        %v1190 = vand.u32 %v1189, 4294901760
        %v1191 = vsub.f32 %v1189, %v1190
        %v1192 = vand.u32 %v1191, 4294901760
        %1193 = vmatpush1.msra.mxu0 %v1192
        %1194 = vmatprep.subr.mxu0 0.0
        %v1195 = vand.u32 %v393, 4294901760
        %v1196 = vsub.f32 %v393, %v1195
        %v1197 = vand.u32 %v1196, 4294901760
        %v1198 = vsub.f32 %v1196, %v1197
        %v1199 = vand.u32 %v1198, 4294901760
        %1200 = vmatpush1.msra.mxu0 %v1199
        %1201 = vmatprep.subr.mxu0 0.0
        %v1202 = vand.u32 %v394, 4294901760
        %v1203 = vsub.f32 %v394, %v1202
        %v1204 = vand.u32 %v1203, 4294901760
        %v1205 = vsub.f32 %v1203, %v1204
        %v1206 = vand.u32 %v1205, 4294901760
        %1207 = vmatpush1.msra.mxu0 %v1206
        %1208 = vmatprep.subr.mxu0 0.0
        %v1209 = vand.u32 %v395, 4294901760
        %v1210 = vsub.f32 %v395, %v1209
        %v1211 = vand.u32 %v1210, 4294901760
        %v1212 = vsub.f32 %v1210, %v1211
        %v1213 = vand.u32 %v1212, 4294901760
        %1214 = vmatpush1.msra.mxu0 %v1213
        %1215 = vmatprep.subr.mxu0 0.0
        %v1216 = vand.u32 %v396, 4294901760
        %v1217 = vsub.f32 %v396, %v1216
        %v1218 = vand.u32 %v1217, 4294901760
        %v1219 = vsub.f32 %v1217, %v1218
        %v1220 = vand.u32 %v1219, 4294901760
        %1221 = vmatpush1.msra.mxu0 %v1220
        %1222 = vmatprep.subr.mxu0 0.0
        %v1223 = vand.u32 %v397, 4294901760
        %v1224 = vsub.f32 %v397, %v1223
        %v1225 = vand.u32 %v1224, 4294901760
        %v1226 = vsub.f32 %v1224, %v1225
        %v1227 = vand.u32 %v1226, 4294901760
        %1228 = vmatpush1.msra.mxu0 %v1227
        %1229 = vmatprep.subr.mxu0 0.0
        %v1230 = vand.u32 %v398, 4294901760
        %v1231 = vsub.f32 %v398, %v1230
        %v1232 = vand.u32 %v1231, 4294901760
        %v1233 = vsub.f32 %v1231, %v1232
        %v1234 = vand.u32 %v1233, 4294901760
        %1235 = vmatpush1.msra.mxu0 %v1234
        %1236 = vmatprep.subr.mxu0 0.0
        %v1237 = vand.u32 %v399, 4294901760
        %v1238 = vsub.f32 %v399, %v1237
        %v1239 = vand.u32 %v1238, 4294901760
        %v1240 = vsub.f32 %v1238, %v1239
        %v1241 = vand.u32 %v1240, 4294901760
        %1242 = vmatpush1.msra.mxu0 %v1241
        %1243 = vmatprep.subr.mxu0 0.0
        %v1244 = vand.u32 %v400, 4294901760
        %v1245 = vsub.f32 %v400, %v1244
        %v1246 = vand.u32 %v1245, 4294901760
        %v1247 = vsub.f32 %v1245, %v1246
        %v1248 = vand.u32 %v1247, 4294901760
        %1249 = vmatpush1.msra.mxu0 %v1248
        %1250 = vmatprep.subr.mxu0 0.0
        %1251 = vmatpush1.msra.mxu0 0.0
        %1252 = vmatprep.subr.mxu0 0.0
        %1253 = vmatpush1.msra.mxu0 0.0
        %1254 = vmatprep.subr.mxu0 0.0
        %1255 = vmatpush1.msra.mxu0 0.0
        %1256 = vmatprep.subr.mxu0 0.0
        %1257 = vmatpush1.msra.mxu0 0.0
        %1258 = vmatprep.subr.mxu0 0.0
        %1259 = vmatpush1.msra.mxu0 0.0
        %1260 = vmatprep.subr.mxu0 0.0
        %1261 = vmatpush1.msra.mxu0 0.0
        %1262 = vmatprep.subr.mxu0 0.0
        %1263 = vmatpush1.msra.mxu0 0.0
        %1264 = vmatprep.subr.mxu0 0.0
        %1265 = vmatpush1.msra.mxu0 0.0
        %1266 = vmatprep.subr.mxu0 0.0
        %1267 = vmatpush1.msra.mxu0 0.0
        %1268 = vmatprep.subr.mxu0 0.0
        %1269 = vmatpush1.msra.mxu0 0.0
        %1270 = vmatprep.subr.mxu0 0.0
        %1271 = vmatpush1.msra.mxu0 0.0
        %1272 = vmatprep.subr.mxu0 0.0
        %1273 = vmatpush1.msra.mxu0 0.0
        %1274 = vmatprep.subr.mxu0 0.0
        %1275 = vmatpush1.msra.mxu0 0.0
        %1276 = vmatprep.subr.mxu0 0.0
        %1277 = vmatpush1.msra.mxu0 0.0
        %1278 = vmatprep.subr.mxu0 0.0
        %1279 = vmatpush1.msra.mxu0 0.0
        %1280 = vmatprep.subr.mxu0 0.0
        %1281 = vmatpush1.msra.mxu0 0.0
        %1282 = vmatprep.mubr.f32.mxu0 0.0
        %v1283 = vand.u32 %v368, 4294901760
        %1284 = vmatmul.mubr.f32.gmra.mrb[0].mxu0 %v1283
        %v1285 = vpop.f32.mrb[0].mxu0
        %v1286 = vadd.f32 %v1135, %v1285
        %v1287 = vpop.f32.mrb[0].mxu0
        %1288 = vdwg.mxu0
        %1289 = vmatprep.subr.mxu0 0.0
        %v1290 = vand.u32 %v385, 4294901760
        %v1291 = vsub.f32 %v385, %v1290
        %1292 = vmatpush1.msra.mxu0 %v1291
        %1293 = vmatprep.subr.mxu0 0.0
        %v1294 = vand.u32 %v386, 4294901760
        %v1295 = vsub.f32 %v386, %v1294
        %1296 = vmatpush1.msra.mxu0 %v1295
        %1297 = vmatprep.subr.mxu0 0.0
        %v1298 = vand.u32 %v387, 4294901760
        %v1299 = vsub.f32 %v387, %v1298
        %1300 = vmatpush1.msra.mxu0 %v1299
        %1301 = vmatprep.subr.mxu0 0.0
        %v1302 = vand.u32 %v388, 4294901760
        %v1303 = vsub.f32 %v388, %v1302
        %1304 = vmatpush1.msra.mxu0 %v1303
        %1305 = vmatprep.subr.mxu0 0.0
        %v1306 = vand.u32 %v389, 4294901760
        %v1307 = vsub.f32 %v389, %v1306
        %1308 = vmatpush1.msra.mxu0 %v1307
        %1309 = vmatprep.subr.mxu0 0.0
        %v1310 = vand.u32 %v390, 4294901760
        %v1311 = vsub.f32 %v390, %v1310
        %1312 = vmatpush1.msra.mxu0 %v1311
        %1313 = vmatprep.subr.mxu0 0.0
        %v1314 = vand.u32 %v391, 4294901760
        %v1315 = vsub.f32 %v391, %v1314
        %1316 = vmatpush1.msra.mxu0 %v1315
        %1317 = vmatprep.subr.mxu0 0.0
        %v1318 = vand.u32 %v392, 4294901760
        %v1319 = vsub.f32 %v392, %v1318
        %1320 = vmatpush1.msra.mxu0 %v1319
        %1321 = vmatprep.subr.mxu0 0.0
        %v1322 = vand.u32 %v393, 4294901760
        %v1323 = vsub.f32 %v393, %v1322
        %1324 = vmatpush1.msra.mxu0 %v1323
        %1325 = vmatprep.subr.mxu0 0.0
        %v1326 = vand.u32 %v394, 4294901760
        %v1327 = vsub.f32 %v394, %v1326
        %1328 = vmatpush1.msra.mxu0 %v1327
        %1329 = vmatprep.subr.mxu0 0.0
        %v1330 = vand.u32 %v395, 4294901760
        %v1331 = vsub.f32 %v395, %v1330
        %1332 = vmatpush1.msra.mxu0 %v1331
        %1333 = vmatprep.subr.mxu0 0.0
        %v1334 = vand.u32 %v396, 4294901760
        %v1335 = vsub.f32 %v396, %v1334
        %1336 = vmatpush1.msra.mxu0 %v1335
        %1337 = vmatprep.subr.mxu0 0.0
        %v1338 = vand.u32 %v397, 4294901760
        %v1339 = vsub.f32 %v397, %v1338
        %1340 = vmatpush1.msra.mxu0 %v1339
        %1341 = vmatprep.subr.mxu0 0.0
        %v1342 = vand.u32 %v398, 4294901760
        %v1343 = vsub.f32 %v398, %v1342
        %1344 = vmatpush1.msra.mxu0 %v1343
        %1345 = vmatprep.subr.mxu0 0.0
        %v1346 = vand.u32 %v399, 4294901760
        %v1347 = vsub.f32 %v399, %v1346
        %1348 = vmatpush1.msra.mxu0 %v1347
        %1349 = vmatprep.subr.mxu0 0.0
        %v1350 = vand.u32 %v400, 4294901760
        %v1351 = vsub.f32 %v400, %v1350
        %1352 = vmatpush1.msra.mxu0 %v1351
        %1353 = vmatprep.subr.mxu0 0.0
        %1354 = vmatpush1.msra.mxu0 0.0
        %1355 = vmatprep.subr.mxu0 0.0
        %1356 = vmatpush1.msra.mxu0 0.0
        %1357 = vmatprep.subr.mxu0 0.0
        %1358 = vmatpush1.msra.mxu0 0.0
        %1359 = vmatprep.subr.mxu0 0.0
        %1360 = vmatpush1.msra.mxu0 0.0
        %1361 = vmatprep.subr.mxu0 0.0
        %1362 = vmatpush1.msra.mxu0 0.0
        %1363 = vmatprep.subr.mxu0 0.0
        %1364 = vmatpush1.msra.mxu0 0.0
        %1365 = vmatprep.subr.mxu0 0.0
        %1366 = vmatpush1.msra.mxu0 0.0
        %1367 = vmatprep.subr.mxu0 0.0
        %1368 = vmatpush1.msra.mxu0 0.0
        %1369 = vmatprep.subr.mxu0 0.0
        %1370 = vmatpush1.msra.mxu0 0.0
        %1371 = vmatprep.subr.mxu0 0.0
        %1372 = vmatpush1.msra.mxu0 0.0
        %1373 = vmatprep.subr.mxu0 0.0
        %1374 = vmatpush1.msra.mxu0 0.0
        %1375 = vmatprep.subr.mxu0 0.0
        %1376 = vmatpush1.msra.mxu0 0.0
        %1377 = vmatprep.subr.mxu0 0.0
        %1378 = vmatpush1.msra.mxu0 0.0
        %1379 = vmatprep.subr.mxu0 0.0
        %1380 = vmatpush1.msra.mxu0 0.0
        %1381 = vmatprep.subr.mxu0 0.0
        %1382 = vmatpush1.msra.mxu0 0.0
        %1383 = vmatprep.subr.mxu0 0.0
        %1384 = vmatpush1.msra.mxu0 0.0
        %1385 = vmatprep.mubr.f32.mxu0 0.0
        %v1386 = vand.u32 %v368, 4294901760
        %v1387 = vsub.f32 %v368, %v1386
        %1388 = vmatmul.mubr.f32.gmra.mrb[0].mxu0 %v1387
        %v1389 = vpop.f32.mrb[0].mxu0
        %v1390 = vadd.f32 %v1286, %v1389
        %v1391 = vpop.f32.mrb[0].mxu0
        %1392 = vdwg.mxu0
        %1393 = vmatprep.subr.mxu0 0.0
        %v1394 = vand.u32 %v385, 4294901760
        %1395 = vmatpush1.msra.mxu0 %v1394
        %1396 = vmatprep.subr.mxu0 0.0
        %v1397 = vand.u32 %v386, 4294901760
        %1398 = vmatpush1.msra.mxu0 %v1397
        %1399 = vmatprep.subr.mxu0 0.0
        %v1400 = vand.u32 %v387, 4294901760
        %1401 = vmatpush1.msra.mxu0 %v1400
        %1402 = vmatprep.subr.mxu0 0.0
        %v1403 = vand.u32 %v388, 4294901760
        %1404 = vmatpush1.msra.mxu0 %v1403
        %1405 = vmatprep.subr.mxu0 0.0
        %v1406 = vand.u32 %v389, 4294901760
        %1407 = vmatpush1.msra.mxu0 %v1406
        %1408 = vmatprep.subr.mxu0 0.0
        %v1409 = vand.u32 %v390, 4294901760
        %1410 = vmatpush1.msra.mxu0 %v1409
        %1411 = vmatprep.subr.mxu0 0.0
        %v1412 = vand.u32 %v391, 4294901760
        %1413 = vmatpush1.msra.mxu0 %v1412
        %1414 = vmatprep.subr.mxu0 0.0
        %v1415 = vand.u32 %v392, 4294901760
        %1416 = vmatpush1.msra.mxu0 %v1415
        %1417 = vmatprep.subr.mxu0 0.0
        %v1418 = vand.u32 %v393, 4294901760
        %1419 = vmatpush1.msra.mxu0 %v1418
        %1420 = vmatprep.subr.mxu0 0.0
        %v1421 = vand.u32 %v394, 4294901760
        %1422 = vmatpush1.msra.mxu0 %v1421
        %1423 = vmatprep.subr.mxu0 0.0
        %v1424 = vand.u32 %v395, 4294901760
        %1425 = vmatpush1.msra.mxu0 %v1424
        %1426 = vmatprep.subr.mxu0 0.0
        %v1427 = vand.u32 %v396, 4294901760
        %1428 = vmatpush1.msra.mxu0 %v1427
        %1429 = vmatprep.subr.mxu0 0.0
        %v1430 = vand.u32 %v397, 4294901760
        %1431 = vmatpush1.msra.mxu0 %v1430
        %1432 = vmatprep.subr.mxu0 0.0
        %v1433 = vand.u32 %v398, 4294901760
        %1434 = vmatpush1.msra.mxu0 %v1433
        %1435 = vmatprep.subr.mxu0 0.0
        %v1436 = vand.u32 %v399, 4294901760
        %1437 = vmatpush1.msra.mxu0 %v1436
        %1438 = vmatprep.subr.mxu0 0.0
        %v1439 = vand.u32 %v400, 4294901760
        %1440 = vmatpush1.msra.mxu0 %v1439
        %1441 = vmatprep.subr.mxu0 0.0
        %1442 = vmatpush1.msra.mxu0 0.0
        %1443 = vmatprep.subr.mxu0 0.0
        %1444 = vmatpush1.msra.mxu0 0.0
        %1445 = vmatprep.subr.mxu0 0.0
        %1446 = vmatpush1.msra.mxu0 0.0
        %1447 = vmatprep.subr.mxu0 0.0
        %1448 = vmatpush1.msra.mxu0 0.0
        %1449 = vmatprep.subr.mxu0 0.0
        %1450 = vmatpush1.msra.mxu0 0.0
        %1451 = vmatprep.subr.mxu0 0.0
        %1452 = vmatpush1.msra.mxu0 0.0
        %1453 = vmatprep.subr.mxu0 0.0
        %1454 = vmatpush1.msra.mxu0 0.0
        %1455 = vmatprep.subr.mxu0 0.0
        %1456 = vmatpush1.msra.mxu0 0.0
        %1457 = vmatprep.subr.mxu0 0.0
        %1458 = vmatpush1.msra.mxu0 0.0
        %1459 = vmatprep.subr.mxu0 0.0
        %1460 = vmatpush1.msra.mxu0 0.0
        %1461 = vmatprep.subr.mxu0 0.0
        %1462 = vmatpush1.msra.mxu0 0.0
        %1463 = vmatprep.subr.mxu0 0.0
        %1464 = vmatpush1.msra.mxu0 0.0
        %1465 = vmatprep.subr.mxu0 0.0
        %1466 = vmatpush1.msra.mxu0 0.0
        %1467 = vmatprep.subr.mxu0 0.0
        %1468 = vmatpush1.msra.mxu0 0.0
        %1469 = vmatprep.subr.mxu0 0.0
        %1470 = vmatpush1.msra.mxu0 0.0
        %1471 = vmatprep.subr.mxu0 0.0
        %1472 = vmatpush1.msra.mxu0 0.0
        %1473 = vmatprep.mubr.f32.mxu0 0.0
        %v1474 = vand.u32 %v368, 4294901760
        %v1475 = vsub.f32 %v368, %v1474
        %v1476 = vand.u32 %v1475, 4294901760
        %1477 = vmatmul.mubr.f32.gmra.mrb[0].mxu0 %v1476
        %v1478 = vpop.f32.mrb[0].mxu0
        %v1479 = vadd.f32 %v1390, %v1478
        %v1480 = vpop.f32.mrb[0].mxu0
        %1481 = vdwg.mxu0
        %1482 = vmatprep.subr.mxu0 0.0
        %v1483 = vand.u32 %v385, 4294901760
        %v1484 = vsub.f32 %v385, %v1483
        %v1485 = vand.u32 %v1484, 4294901760
        %1486 = vmatpush1.msra.mxu0 %v1485
        %1487 = vmatprep.subr.mxu0 0.0
        %v1488 = vand.u32 %v386, 4294901760
        %v1489 = vsub.f32 %v386, %v1488
        %v1490 = vand.u32 %v1489, 4294901760
        %1491 = vmatpush1.msra.mxu0 %v1490
        %1492 = vmatprep.subr.mxu0 0.0
        %v1493 = vand.u32 %v387, 4294901760
        %v1494 = vsub.f32 %v387, %v1493
        %v1495 = vand.u32 %v1494, 4294901760
        %1496 = vmatpush1.msra.mxu0 %v1495
        %1497 = vmatprep.subr.mxu0 0.0
        %v1498 = vand.u32 %v388, 4294901760
        %v1499 = vsub.f32 %v388, %v1498
        %v1500 = vand.u32 %v1499, 4294901760
        %1501 = vmatpush1.msra.mxu0 %v1500
        %1502 = vmatprep.subr.mxu0 0.0
        %v1503 = vand.u32 %v389, 4294901760
        %v1504 = vsub.f32 %v389, %v1503
        %v1505 = vand.u32 %v1504, 4294901760
        %1506 = vmatpush1.msra.mxu0 %v1505
        %1507 = vmatprep.subr.mxu0 0.0
        %v1508 = vand.u32 %v390, 4294901760
        %v1509 = vsub.f32 %v390, %v1508
        %v1510 = vand.u32 %v1509, 4294901760
        %1511 = vmatpush1.msra.mxu0 %v1510
        %1512 = vmatprep.subr.mxu0 0.0
        %v1513 = vand.u32 %v391, 4294901760
        %v1514 = vsub.f32 %v391, %v1513
        %v1515 = vand.u32 %v1514, 4294901760
        %1516 = vmatpush1.msra.mxu0 %v1515
        %1517 = vmatprep.subr.mxu0 0.0
        %v1518 = vand.u32 %v392, 4294901760
        %v1519 = vsub.f32 %v392, %v1518
        %v1520 = vand.u32 %v1519, 4294901760
        %1521 = vmatpush1.msra.mxu0 %v1520
        %1522 = vmatprep.subr.mxu0 0.0
        %v1523 = vand.u32 %v393, 4294901760
        %v1524 = vsub.f32 %v393, %v1523
        %v1525 = vand.u32 %v1524, 4294901760
        %1526 = vmatpush1.msra.mxu0 %v1525
        %1527 = vmatprep.subr.mxu0 0.0
        %v1528 = vand.u32 %v394, 4294901760
        %v1529 = vsub.f32 %v394, %v1528
        %v1530 = vand.u32 %v1529, 4294901760
        %1531 = vmatpush1.msra.mxu0 %v1530
        %1532 = vmatprep.subr.mxu0 0.0
        %v1533 = vand.u32 %v395, 4294901760
        %v1534 = vsub.f32 %v395, %v1533
        %v1535 = vand.u32 %v1534, 4294901760
        %1536 = vmatpush1.msra.mxu0 %v1535
        %1537 = vmatprep.subr.mxu0 0.0
        %v1538 = vand.u32 %v396, 4294901760
        %v1539 = vsub.f32 %v396, %v1538
        %v1540 = vand.u32 %v1539, 4294901760
        %1541 = vmatpush1.msra.mxu0 %v1540
        %1542 = vmatprep.subr.mxu0 0.0
        %v1543 = vand.u32 %v397, 4294901760
        %v1544 = vsub.f32 %v397, %v1543
        %v1545 = vand.u32 %v1544, 4294901760
        %1546 = vmatpush1.msra.mxu0 %v1545
        %1547 = vmatprep.subr.mxu0 0.0
        %v1548 = vand.u32 %v398, 4294901760
        %v1549 = vsub.f32 %v398, %v1548
        %v1550 = vand.u32 %v1549, 4294901760
        %1551 = vmatpush1.msra.mxu0 %v1550
        %1552 = vmatprep.subr.mxu0 0.0
        %v1553 = vand.u32 %v399, 4294901760
        %v1554 = vsub.f32 %v399, %v1553
        %v1555 = vand.u32 %v1554, 4294901760
        %1556 = vmatpush1.msra.mxu0 %v1555
        %1557 = vmatprep.subr.mxu0 0.0
        %v1558 = vand.u32 %v400, 4294901760
        %v1559 = vsub.f32 %v400, %v1558
        %v1560 = vand.u32 %v1559, 4294901760
        %1561 = vmatpush1.msra.mxu0 %v1560
        %1562 = vmatprep.subr.mxu0 0.0
        %1563 = vmatpush1.msra.mxu0 0.0
        %1564 = vmatprep.subr.mxu0 0.0
        %1565 = vmatpush1.msra.mxu0 0.0
        %1566 = vmatprep.subr.mxu0 0.0
        %1567 = vmatpush1.msra.mxu0 0.0
        %1568 = vmatprep.subr.mxu0 0.0
        %1569 = vmatpush1.msra.mxu0 0.0
        %1570 = vmatprep.subr.mxu0 0.0
        %1571 = vmatpush1.msra.mxu0 0.0
        %1572 = vmatprep.subr.mxu0 0.0
        %1573 = vmatpush1.msra.mxu0 0.0
        %1574 = vmatprep.subr.mxu0 0.0
        %1575 = vmatpush1.msra.mxu0 0.0
        %1576 = vmatprep.subr.mxu0 0.0
        %1577 = vmatpush1.msra.mxu0 0.0
        %1578 = vmatprep.subr.mxu0 0.0
        %1579 = vmatpush1.msra.mxu0 0.0
        %1580 = vmatprep.subr.mxu0 0.0
        %1581 = vmatpush1.msra.mxu0 0.0
        %1582 = vmatprep.subr.mxu0 0.0
        %1583 = vmatpush1.msra.mxu0 0.0
        %1584 = vmatprep.subr.mxu0 0.0
        %1585 = vmatpush1.msra.mxu0 0.0
        %1586 = vmatprep.subr.mxu0 0.0
        %1587 = vmatpush1.msra.mxu0 0.0
        %1588 = vmatprep.subr.mxu0 0.0
        %1589 = vmatpush1.msra.mxu0 0.0
        %1590 = vmatprep.subr.mxu0 0.0
        %1591 = vmatpush1.msra.mxu0 0.0
        %1592 = vmatprep.subr.mxu0 0.0
        %1593 = vmatpush1.msra.mxu0 0.0
        %1594 = vmatprep.mubr.f32.mxu0 0.0
        %v1595 = vand.u32 %v368, 4294901760
        %1596 = vmatmul.mubr.f32.gmra.mrb[0].mxu0 %v1595
        %v1597 = vpop.f32.mrb[0].mxu0
        %v1598 = vadd.f32 %v1479, %v1597
        %v1599 = vpop.f32.mrb[0].mxu0
        %1600 = vdwg.mxu0
        %1601 = vmatprep.subr.mxu0 0.0
        %v1602 = vand.u32 %v385, 4294901760
        %1603 = vmatpush1.msra.mxu0 %v1602
        %1604 = vmatprep.subr.mxu0 0.0
        %v1605 = vand.u32 %v386, 4294901760
        %1606 = vmatpush1.msra.mxu0 %v1605
        %1607 = vmatprep.subr.mxu0 0.0
        %v1608 = vand.u32 %v387, 4294901760
        %1609 = vmatpush1.msra.mxu0 %v1608
        %1610 = vmatprep.subr.mxu0 0.0
        %v1611 = vand.u32 %v388, 4294901760
        %1612 = vmatpush1.msra.mxu0 %v1611
        %1613 = vmatprep.subr.mxu0 0.0
        %v1614 = vand.u32 %v389, 4294901760
        %1615 = vmatpush1.msra.mxu0 %v1614
        %1616 = vmatprep.subr.mxu0 0.0
        %v1617 = vand.u32 %v390, 4294901760
        %1618 = vmatpush1.msra.mxu0 %v1617
        %1619 = vmatprep.subr.mxu0 0.0
        %v1620 = vand.u32 %v391, 4294901760
        %1621 = vmatpush1.msra.mxu0 %v1620
        %1622 = vmatprep.subr.mxu0 0.0
        %v1623 = vand.u32 %v392, 4294901760
        %1624 = vmatpush1.msra.mxu0 %v1623
        %1625 = vmatprep.subr.mxu0 0.0
        %v1626 = vand.u32 %v393, 4294901760
        %1627 = vmatpush1.msra.mxu0 %v1626
        %1628 = vmatprep.subr.mxu0 0.0
        %v1629 = vand.u32 %v394, 4294901760
        %1630 = vmatpush1.msra.mxu0 %v1629
        %1631 = vmatprep.subr.mxu0 0.0
        %v1632 = vand.u32 %v395, 4294901760
        %1633 = vmatpush1.msra.mxu0 %v1632
        %1634 = vmatprep.subr.mxu0 0.0
        %v1635 = vand.u32 %v396, 4294901760
        %1636 = vmatpush1.msra.mxu0 %v1635
        %1637 = vmatprep.subr.mxu0 0.0
        %v1638 = vand.u32 %v397, 4294901760
        %1639 = vmatpush1.msra.mxu0 %v1638
        %1640 = vmatprep.subr.mxu0 0.0
        %v1641 = vand.u32 %v398, 4294901760
        %1642 = vmatpush1.msra.mxu0 %v1641
        %1643 = vmatprep.subr.mxu0 0.0
        %v1644 = vand.u32 %v399, 4294901760
        %1645 = vmatpush1.msra.mxu0 %v1644
        %1646 = vmatprep.subr.mxu0 0.0
        %v1647 = vand.u32 %v400, 4294901760
        %1648 = vmatpush1.msra.mxu0 %v1647
        %1649 = vmatprep.subr.mxu0 0.0
        %1650 = vmatpush1.msra.mxu0 0.0
        %1651 = vmatprep.subr.mxu0 0.0
        %1652 = vmatpush1.msra.mxu0 0.0
        %1653 = vmatprep.subr.mxu0 0.0
        %1654 = vmatpush1.msra.mxu0 0.0
        %1655 = vmatprep.subr.mxu0 0.0
        %1656 = vmatpush1.msra.mxu0 0.0
        %1657 = vmatprep.subr.mxu0 0.0
        %1658 = vmatpush1.msra.mxu0 0.0
        %1659 = vmatprep.subr.mxu0 0.0
        %1660 = vmatpush1.msra.mxu0 0.0
        %1661 = vmatprep.subr.mxu0 0.0
        %1662 = vmatpush1.msra.mxu0 0.0
        %1663 = vmatprep.subr.mxu0 0.0
        %1664 = vmatpush1.msra.mxu0 0.0
        %1665 = vmatprep.subr.mxu0 0.0
        %1666 = vmatpush1.msra.mxu0 0.0
        %1667 = vmatprep.subr.mxu0 0.0
        %1668 = vmatpush1.msra.mxu0 0.0
        %1669 = vmatprep.subr.mxu0 0.0
        %1670 = vmatpush1.msra.mxu0 0.0
        %1671 = vmatprep.subr.mxu0 0.0
        %1672 = vmatpush1.msra.mxu0 0.0
        %1673 = vmatprep.subr.mxu0 0.0
        %1674 = vmatpush1.msra.mxu0 0.0
        %1675 = vmatprep.subr.mxu0 0.0
        %1676 = vmatpush1.msra.mxu0 0.0
        %1677 = vmatprep.subr.mxu0 0.0
        %1678 = vmatpush1.msra.mxu0 0.0
        %1679 = vmatprep.subr.mxu0 0.0
        %1680 = vmatpush1.msra.mxu0 0.0
        %1681 = vmatprep.mubr.f32.mxu0 0.0
        %v1682 = vand.u32 %v368, 4294901760
        %1683 = vmatmul.mubr.f32.gmra.mrb[0].mxu0 %v1682
        %v1684 = vpop.f32.mrb[0].mxu0
        %v1685 = vadd.f32 %v1598, %v1684
        %v1686 = vpop.f32.mrb[0].mxu0
        %1687 = vdwg.mxu0
        %v1688 = vtanh.pop %v1685
        %v1689 = vld [vmem:[%s5] sm:$0x1]
        %v1691 = vlaneseq
        %v1692 = vshrl.u32 %v1691, 7
        %v1693 = vsub.s32 0, %v1692
        %v1694 = vrot.slane %v1689, %v1693
        %v1696 = vmul.f32 %v1688, %v1694
        %1697 = vadd.xlane.f32.xlu0 %v1696
        %v1698 = vpop.xlane.xlu0 %1697
        %v1699 = vrot.slane %v1698, 4
        %v1700 = vmax.f32 %v1698, %v1699
        %v1701 = vrot.slane %v1700, 2
        %v1702 = vmax.f32 %v1700, %v1701
        %v1703 = vrot.slane %v1702, 1
        %v1704 = vmax.f32 %v1702, %v1703
        %v1705 = vsub.f32 %v1698, %v1704
        %v1706 = vmul.f32 %v1705, 1.442695
        %v1707 = vpow.pop %v1706
        %v1708 = vrot.slane %v1707, 4
        %v1709 = vadd.f32 %v1707, %v1708
        %v1710 = vrot.slane %v1709, 2
        %v1711 = vadd.f32 %v1709, %v1710
        %v1712 = vrot.slane %v1711, 1
        %v1713 = vadd.f32 %v1711, %v1712
        %v1714 = vrcp.pop %v1713
        %v1715 = vmul.f32 %v1707, %v1714
        %v1716 = vmul.f32 %v1715, %v368
        %v1717 = vrot.slane %v1716, 4
        %v1718 = vadd.f32 %v1716, %v1717
        %v1719 = vrot.slane %v1718, 2
        %v1720 = vadd.f32 %v1718, %v1719
        %v1721 = vrot.slane %v1720, 1
        %v1722 = vadd.f32 %v1720, %v1721
        %1723 = vst [vmem:[%s356] sm:$0x1] %v1722
        %vm1724 = vcmask 7168
        %1725 = vst.msk [vmem:[%s366] sm:$0xff] %vm1724, %v1715
        %s1726 = sand.u32 %s173, 1
        %s1727 = scalar_lea.sflag [#allocation4], %s1726
        %s1728 = sand.u32 %s173, 1
        %s1729 = scalar_lea.vmem [#allocation10], %s1728
        %p1730 = scmp.lt.s32.totalorder %s29, 1
        %s1731 = scalar_select %p1730, %s29, 1
        %s1732 = smul.addr %s1731, 8
        %s1733 = scalar_lea.vmem %s7, %s1732
        // Predicated region
        $region61: #{bahdanau_attention.1} parent=43 // pred_check
          %p1734 = pneg %p183
        $region62: #{bahdanau_attention.1} parent=43 // pred_check_branch
          %1736 = sbr.rel (%p1734) target = $region64
        $region63: #{bahdanau_attention.1} parent=43 // pred_region
          %s1738 = ssub.s32 16, 16
          %1739 = vsyncadd %s1727, %s1738
          %s1740 = smul.addr %s29, 16
          %s1741 = scalar_lea.hbm %s6, %s1740
          %s1743 = sshll.u32 %s1729, 4
          %s1744 = int_to_ptr.vmem [resolvable:$true] %s1743
          %1746 = dma.vmem_to_hbm [thread:$0]  %s1744, 16, %s1741, %s1727
        $region64: #{bahdanau_attention.1} parent=43 // pred_fallthru
          _
        // Predicated region
        $region65: #{bahdanau_attention.1} parent=43 // pred_check
          %p1747 = pneg %p209
        $region66: #{bahdanau_attention.1} parent=43 // pred_check_branch
          %1749 = sbr.rel (%p1747) target = $region68
        $region67: #{bahdanau_attention.1} parent=43 // pred_region
          _
        $region68: #{bahdanau_attention.1} parent=43 // pred_fallthru
          _
      $region44: #{bahdanau_attention.1} parent=5 // pred_fallthru
        _
      %p1750 = scmp.le.s32.totalorder 2, %s24
      // Predicated region
      $region69: #{bahdanau_attention.1} parent=5 // pred_check
        %p1751 = pneg %p1750
      $region70: #{bahdanau_attention.1} parent=5 // pred_check_branch
        %1753 = sbr.rel (%p1751) target = $region72
      $region71: #{bahdanau_attention.1} parent=5 // pred_region
        %s1754 = ssub.s32 %s24, 2
        // Predicated region
        $region73: #{bahdanau_attention.1} parent=71 // pred_check
          %p1755 = pneg %p189
        $region74: #{bahdanau_attention.1} parent=71 // pred_check_branch
          %1757 = sbr.rel (%p1755) target = $region76
        $region75: #{bahdanau_attention.1} parent=71 // pred_region
          %s1758 = sand.u32 %s174, 1
          %s1759 = scalar_lea.sflag [#allocation4], %s1758
          %s1760 = sand.u32 %s174, 1
          %s1761 = scalar_lea.vmem [#allocation10], %s1760
          %1762 = dma.done %s1759, 16
        $region76: #{bahdanau_attention.1} parent=71 // pred_fallthru
          _
        // Predicated region
        $region77: #{bahdanau_attention.1} parent=71 // pred_check
          %p1763 = pneg %p215
        $region78: #{bahdanau_attention.1} parent=71 // pred_check_branch
          %1765 = sbr.rel (%p1763) target = $region80
        $region79: #{bahdanau_attention.1} parent=71 // pred_region
          %p1766 = scmp.lt.s32.totalorder %s30, 1
          %s1767 = scalar_select %p1766, %s30, 1
          %s1768 = smul.addr %s1767, 8
          %s1769 = scalar_lea.vmem %s7, %s1768
        $region80: #{bahdanau_attention.1} parent=71 // pred_fallthru
          _
      $region72: #{bahdanau_attention.1} parent=5 // pred_fallthru
        _
    $region6: #{bahdanau_attention.1} parent=1 // loop_footer
      %s28 = sadd.s32 1, %s24
    $region7: #{bahdanau_attention.1} parent=1 // loop_footer_branch
      %23 = sbr.rel target = $region3
    $region8: #{bahdanau_attention.1} parent=1 // loop_exit
      _
    %1770 = vsyncpa [#allocation3], 1
    %s1771 = scalar_lea.sflag [#allocation3], 1
    %1772 = vsyncpa %s1771, 1
    %1773 = vsyncpa [#allocation6], 1
    %s1774 = scalar_lea.sflag [#allocation6], 1
    %1775 = vsyncpa %s1774, 1
    %1776 = vsyncpa [#allocation9], 1
    %1777 = vsyncpa [#allocation4], 1
    %s1778 = scalar_lea.sflag [#allocation4], 1
    %1779 = vsyncpa %s1778, 1

</llo_original>
